<compile_context>
chip_gen: v5e
topology: v5e:2x2
jax: 0.10.0
libtpu: 0.0.40
codegen_flags: <defaults>
</compile_context>

<pallas_src>
import jax
import jax.numpy as jnp
from jax import lax
from jax.experimental import pallas as pl
from jax.experimental.pallas import tpu as pltpu


def bottleneck_kernel(x_ref, w1_ref, s1_ref, b1_ref,
                      w2_ref, s2_ref, b2_ref,
                      w3_ref, s3_ref, b3_ref,
                      out_ref, pad_ref, patch_ref):
    # x_ref:     (H, W, Cin)        one image (batch dim squeezed by BlockSpec)
    # w1_ref:    (Cin, P)           1x1 conv           (matmul dtype)
    # w2_ref:    (9*P, P)           3x3 conv, im2col-flattened HWIO (matmul dtype)
    # w3_ref:    (P, Cout)          1x1 conv           (matmul dtype)
    # s*_ref/b*_ref: (1, C)         folded BatchNorm scale / bias (f32)
    # pad_ref:   VMEM (H+2, W+2, P) padded conv2 input scratch
    # patch_ref: VMEM (H*W, 9*P)    im2col patches scratch
    H, W, Cin = x_ref.shape
    P = w1_ref.shape[1]
    Cout = w3_ref.shape[1]
    mm_dtype = w1_ref.dtype

    x2d = x_ref[...].reshape(H * W, Cin)            # f32, kept for the residual add

    # ---- conv1 (1x1) + bn1 + relu1 ----------------------------------------
    h1 = jnp.dot(x2d.astype(mm_dtype), w1_ref[...],
                 preferred_element_type=jnp.float32)
    h1 = jnp.maximum(h1 * s1_ref[...] + b1_ref[...], 0.0)

    # ---- conv2 (3x3, stride=1, pad=1) + bn2 + relu2 ------------------------
    # Zero only the 1-pixel halo of the padded scratch (scratch persists across
    # grid steps, so the halo must be (re)written every step; the interior is
    # fully overwritten by h1 below).
    pad_ref[0:1, :, :] = jnp.zeros((1, W + 2, P), pad_ref.dtype)
    pad_ref[H + 1:H + 2, :, :] = jnp.zeros((1, W + 2, P), pad_ref.dtype)
    pad_ref[:, 0:1, :] = jnp.zeros((H + 2, 1, P), pad_ref.dtype)
    pad_ref[:, W + 1:W + 2, :] = jnp.zeros((H + 2, 1, P), pad_ref.dtype)
    pad_ref[1:H + 1, 1:W + 1, :] = h1.reshape(H, W, P).astype(pad_ref.dtype)

    # Build im2col patches (H*W, 9*P) and do a single K=9*P MXU matmul.
    for dy in range(3):                  # static -> fully unrolled (9 copies)
        for dx in range(3):
            tap = dy * 3 + dx
            patch_ref[:, tap * P:(tap + 1) * P] = (
                pad_ref[dy:dy + H, dx:dx + W, :].reshape(H * W, P))
    h2 = jnp.dot(patch_ref[...], w2_ref[...],
                 preferred_element_type=jnp.float32)
    h2 = jnp.maximum(h2 * s2_ref[...] + b2_ref[...], 0.0)

    # ---- conv3 (1x1) + bn3 + residual add + relu3 --------------------------
    h3 = jnp.dot(h2.astype(mm_dtype), w3_ref[...],
                 preferred_element_type=jnp.float32)
    h3 = h3 * s3_ref[...] + b3_ref[...]
    out_ref[...] = jnp.maximum(h3 + x2d, 0.0).reshape(H, W, Cout)


def res_bottleneck(x_nhwc, w1, s1, b1, w2, s2, b2, w3, s3, b3,
                   *, matmul_dtype=jnp.bfloat16):
    """Identity-shortcut bottleneck. x_nhwc: (N,H,W,Cin), w1:(Cin,P), w2:(3,3,P,P) HWIO,
    w3:(P,Cout); s*/b*: folded-BN (1,C) scale/bias."""
    N, H, W, Cin = x_nhwc.shape
    Cin_w, P = w1.shape
    Cout = w3.shape[1]
    assert Cin == Cin_w, "conv1 input-channel mismatch"
    assert Cin == Cout == 4 * P, \
        "this kernel implements the identity-shortcut case (stride=1, no downsample)"
    # TODO(synk): spatial (row) tiling with halo DMA for very large H*W tiles;
    #             per-image tiles already fit VMEM for standard ResNet bottlenecks.

    # Pre-cast weights once to the matmul dtype; flatten w2 to (9*P, P) so the
    # im2col matmul contracts over K = 9*P in one shot.
    w1c = w1.astype(matmul_dtype)
    w2c = w2.reshape(9 * P, P).astype(matmul_dtype)
    w3c = w3.astype(matmul_dtype)

    # Weights / scale / bias: constant index_map -> resident across grid steps.
    const2d = lambda shape: pl.BlockSpec(shape, lambda n: (0, 0))
    in_specs = [
        pl.BlockSpec((None, H, W, Cin), lambda n: (n, 0, 0, 0)),   # x (per image)
        const2d((Cin, P)),                                         # w1
        const2d((1, P)), const2d((1, P)),                          # s1, b1
        const2d((9 * P, P)),                                       # w2 (im2col)
        const2d((1, P)), const2d((1, P)),                          # s2, b2
        const2d((P, Cout)),                                        # w3
        const2d((1, Cout)), const2d((1, Cout)),                    # s3, b3
    ]
    out_specs = pl.BlockSpec((None, H, W, Cout), lambda n: (n, 0, 0, 0))

    scratch_shapes = [
        pltpu.VMEM((H + 2, W + 2, P), matmul_dtype),   # padded conv2 input
        pltpu.VMEM((H * W, 9 * P), matmul_dtype),      # im2col patches
    ]

    itemsize = jnp.dtype(matmul_dtype).itemsize
    flops = 2 * N * H * W * (Cin * P + 9 * P * P + P * Cout)
    w_bytes = (w1c.size + w2c.size + w3c.size) * itemsize
    bytes_accessed = (x_nhwc.size + N * H * W * Cout) * 4 + w_bytes
    cost = pl.CostEstimate(flops=flops, transcendentals=0,
                           bytes_accessed=bytes_accessed)

    # Per-step VMEM working set (x/out tiles double-buffered + resident weights +
    # scratches); only raise the scoped limit if the default 32 MiB is too small,
    # and stay under v7x's 64 MiB physical VMEM.
    x_tile = H * W * Cin * 4
    o_tile = H * W * Cout * 4
    sb_bytes = (s1.size + b1.size + s2.size + b2.size + s3.size + b3.size) * 4
    scratch_bytes = ((H + 2) * (W + 2) * P + H * W * 9 * P) * itemsize
    est = 2 * (x_tile + o_tile) + 2 * (w_bytes + sb_bytes) + scratch_bytes + (2 << 20)
    vmem_limit = None if est <= (32 << 20) else int(min(est, 60 << 20))

    return pl.pallas_call(
        bottleneck_kernel,
        out_shape=jax.ShapeDtypeStruct((N, H, W, Cout), jnp.float32),
        grid_spec=pltpu.PrefetchScalarGridSpec(
            num_scalar_prefetch=0,
            grid=(N,),
            in_specs=in_specs,
            out_specs=out_specs,
            scratch_shapes=scratch_shapes,
        ),
        compiler_params=pltpu.CompilerParams(
            dimension_semantics=("parallel",),   # shard batch across v7x's 2 TCs
            vmem_limit_bytes=vmem_limit,
        ),
        cost_estimate=cost,
    )(x_nhwc, w1c, s1, b1, w2c, s2, b2, w3c, s3, b3)


def fold_bn(gamma, beta, mean, var, eps=1e-5):
    scale = gamma / jnp.sqrt(var + eps)
    bias = beta - mean * scale
    return (scale.reshape(1, -1).astype(jnp.float32),
            bias.reshape(1, -1).astype(jnp.float32))


def ref_forward(x, w1, s1, b1, w2, s2, b2, w3, s3, b3):
    """Pure-JAX NHWC f32 reference of the same eval-mode bottleneck."""
    dn = ('NHWC', 'HWIO', 'NHWC')
    Cin, P = w1.shape
    Cout = w3.shape[1]
    h = lax.conv_general_dilated(x, w1.reshape(1, 1, Cin, P), (1, 1), 'VALID',
                                 dimension_numbers=dn)
    h = jnp.maximum(h * s1.reshape(1, 1, 1, -1) + b1.reshape(1, 1, 1, -1), 0.0)
    h = lax.conv_general_dilated(h, w2, (1, 1), ((1, 1), (1, 1)),
                                 dimension_numbers=dn)
    h = jnp.maximum(h * s2.reshape(1, 1, 1, -1) + b2.reshape(1, 1, 1, -1), 0.0)
    h = lax.conv_general_dilated(h, w3.reshape(1, 1, P, Cout), (1, 1), 'VALID',
                                 dimension_numbers=dn)
    h = h * s3.reshape(1, 1, 1, -1) + b3.reshape(1, 1, 1, -1)
    return jnp.maximum(h + x, 0.0)


if __name__ == "__main__":
    # Small shapes: batch=2, planes=4 -> inplanes = planes*4 = 16, spatial 8x8.
    N, H, W = 2, 8, 8
    planes = 4
    inplanes = planes * 4            # expansion = 4, identity-shortcut case
    Cout = planes * 4

    key = jax.random.PRNGKey(0)
    ks = jax.random.split(key, 16)

    # NHWC activations (the NCHW->NHWC transpose is done once at the model
    # boundary, not per bottleneck block).
    x_nhwc = jax.random.normal(ks[0], (N, H, W, inplanes), jnp.float32)

    # Conv weights in PyTorch OIHW, converted to the kernel's layouts.
    w1_torch = 0.1 * jax.random.normal(ks[1], (planes, inplanes, 1, 1), jnp.float32)
    w2_torch = 0.1 * jax.random.normal(ks[2], (planes, planes, 3, 3), jnp.float32)
    w3_torch = 0.1 * jax.random.normal(ks[3], (Cout, planes, 1, 1), jnp.float32)
    w1 = jnp.transpose(w1_torch[:, :, 0, 0], (1, 0))   # (Cin, P)
    w2 = jnp.transpose(w2_torch, (2, 3, 1, 0))          # (kh, kw, I, O)  HWIO
    w3 = jnp.transpose(w3_torch[:, :, 0, 0], (1, 0))    # (P, Cout)

    # BatchNorm params (eval mode), folded into per-channel scale / bias.
    def bn_params(kg, kb, km, kv, c):
        gamma = 1.0 + 0.1 * jax.random.normal(kg, (c,), jnp.float32)
        beta = 0.1 * jax.random.normal(kb, (c,), jnp.float32)
        mean = 0.1 * jax.random.normal(km, (c,), jnp.float32)
        var = jnp.abs(jax.random.normal(kv, (c,), jnp.float32)) + 0.5
        return fold_bn(gamma, beta, mean, var)

    s1, b1 = bn_params(ks[4], ks[5], ks[6], ks[7], planes)
    s2, b2 = bn_params(ks[8], ks[9], ks[10], ks[11], planes)
    s3, b3 = bn_params(ks[12], ks[13], ks[14], ks[15], Cout)

    ref = ref_forward(x_nhwc, w1, s1, b1, w2, s2, b2, w3, s3, b3)

    # f32 matmuls: exact check against the f32 reference.
    out_f32 = res_bottleneck(x_nhwc, w1, s1, b1, w2, s2, b2, w3, s3, b3,
                             matmul_dtype=jnp.float32)
    out_f32 = jax.block_until_ready(out_f32)
    assert out_f32.shape == (N, H, W, Cout)
    assert jnp.allclose(out_f32, ref, atol=1e-4, rtol=1e-4), \
        f"f32 max abs err {jnp.max(jnp.abs(out_f32 - ref))}"

    # bf16 matmuls (v6e/v7x MXU fast path): looser tolerance vs. f32 reference.
    out_bf16 = res_bottleneck(x_nhwc, w1, s1, b1, w2, s2, b2, w3, s3, b3,
                              matmul_dtype=jnp.bfloat16)
    out_bf16 = jax.block_until_ready(out_bf16)
    assert out_bf16.shape == (N, H, W, Cout)
    assert jnp.allclose(out_bf16, ref, atol=5e-2, rtol=5e-2), \
        f"bf16 max abs err {jnp.max(jnp.abs(out_bf16 - ref))}"

    print("KERNEL_OK")
</pallas_src>

<mosaic_0001>
module attributes {stable_mosaic.version = 11 : i64} {
  func.func @bottleneck_kernel(%arg0: i32, %arg1: memref<1x8x8x16xf32, #tpu.memory_space<vmem>>, %arg2: memref<16x4xf32, #tpu.memory_space<vmem>>, %arg3: memref<1x4xf32, #tpu.memory_space<vmem>>, %arg4: memref<1x4xf32, #tpu.memory_space<vmem>>, %arg5: memref<36x4xf32, #tpu.memory_space<vmem>>, %arg6: memref<1x4xf32, #tpu.memory_space<vmem>>, %arg7: memref<1x4xf32, #tpu.memory_space<vmem>>, %arg8: memref<4x16xf32, #tpu.memory_space<vmem>>, %arg9: memref<1x16xf32, #tpu.memory_space<vmem>>, %arg10: memref<1x16xf32, #tpu.memory_space<vmem>>, %arg11: memref<1x8x8x16xf32, #tpu.memory_space<vmem>>, %arg12: memref<10x10x4xf32, #tpu.memory_space<vmem>>, %arg13: memref<64x36xf32, #tpu.memory_space<vmem>>) attributes {dimension_semantics = [#tpu.dimension_semantics<parallel>], iteration_bounds = array<i64: 2>, scalar_prefetch = 0 : i64, scratch_operands = 2 : i64, tpu.core_type = #tpu.core_type<tc>, window_params = [{transform_indices = @transform_0, window_bounds = array<i64: 1, 8, 8, 16>}, {pipeline_mode = #tpu.pipeline_mode<synchronous>, transform_indices = @transform_1, window_bounds = array<i64: 16, 4>}, {pipeline_mode = #tpu.pipeline_mode<synchronous>, transform_indices = @transform_2, window_bounds = array<i64: 1, 4>}, {pipeline_mode = #tpu.pipeline_mode<synchronous>, transform_indices = @transform_3, window_bounds = array<i64: 1, 4>}, {pipeline_mode = #tpu.pipeline_mode<synchronous>, transform_indices = @transform_4, window_bounds = array<i64: 36, 4>}, {pipeline_mode = #tpu.pipeline_mode<synchronous>, transform_indices = @transform_5, window_bounds = array<i64: 1, 4>}, {pipeline_mode = #tpu.pipeline_mode<synchronous>, transform_indices = @transform_6, window_bounds = array<i64: 1, 4>}, {pipeline_mode = #tpu.pipeline_mode<synchronous>, transform_indices = @transform_7, window_bounds = array<i64: 4, 16>}, {pipeline_mode = #tpu.pipeline_mode<synchronous>, transform_indices = @transform_8, window_bounds = array<i64: 1, 16>}, {pipeline_mode = #tpu.pipeline_mode<synchronous>, transform_indices = @transform_9, window_bounds = array<i64: 1, 16>}, {transform_indices = @transform_10, window_bounds = array<i64: 1, 8, 8, 16>}]} {
    %c0 = arith.constant 0 : index
    %c0_0 = arith.constant 0 : index
    %c0_1 = arith.constant 0 : index
    %c0_2 = arith.constant 0 : index
    %0 = vector.load %arg1[%c0, %c0_0, %c0_1, %c0_2] : memref<1x8x8x16xf32, #tpu.memory_space<vmem>>, vector<1x8x8x16xf32>
    %1 = vector.shape_cast %0 : vector<1x8x8x16xf32> to vector<8x8x16xf32>
    %2 = vector.shape_cast %1 : vector<8x8x16xf32> to vector<64x16xf32>
    %c0_3 = arith.constant 0 : index
    %c0_4 = arith.constant 0 : index
    %3 = vector.load %arg2[%c0_3, %c0_4] : memref<16x4xf32, #tpu.memory_space<vmem>>, vector<16x4xf32>
    %cst = arith.constant dense<0.000000e+00> : vector<64x4xf32>
    %4 = tpu.matmul %2, %3, %cst {dimension_numbers = #tpu.dot_dimension_numbers<[1], [0], [0], [1], [0, 0, 1, 1], [], []>} : vector<64x16xf32>, vector<16x4xf32>, vector<64x4xf32> -> vector<64x4xf32>
    %c0_5 = arith.constant 0 : index
    %c0_6 = arith.constant 0 : index
    %5 = vector.load %arg3[%c0_5, %c0_6] : memref<1x4xf32, #tpu.memory_space<vmem>>, vector<1x4xf32>
    %6 = vector.broadcast %5 : vector<1x4xf32> to vector<64x4xf32>
    %7 = arith.mulf %4, %6 : vector<64x4xf32>
    %c0_7 = arith.constant 0 : index
    %c0_8 = arith.constant 0 : index
    %8 = vector.load %arg4[%c0_7, %c0_8] : memref<1x4xf32, #tpu.memory_space<vmem>>, vector<1x4xf32>
    %9 = vector.broadcast %8 : vector<1x4xf32> to vector<64x4xf32>
    %10 = arith.addf %7, %9 : vector<64x4xf32>
    %cst_9 = arith.constant 0.000000e+00 : f32
    %11 = vector.broadcast %cst_9 : f32 to vector<64x4xf32>
    %12 = arith.maximumf %10, %11 : vector<64x4xf32>
    %cst_10 = arith.constant 0.000000e+00 : f32
    %13 = vector.broadcast %cst_10 : f32 to vector<1x10x4xf32>
    %c0_11 = arith.constant 0 : index
    %c0_12 = arith.constant 0 : index
    %c0_13 = arith.constant 0 : index
    %14 = vector.load %arg12[%c0_11, %c0_12, %c0_13] : memref<10x10x4xf32, #tpu.memory_space<vmem>>, vector<1x10x4xf32>
    tpu.vector_store %arg12[%c0_11, %c0_12, %c0_13], %13 {strides = array<i32>} : memref<10x10x4xf32, #tpu.memory_space<vmem>>, vector<1x10x4xf32>,
    %cst_14 = arith.constant 0.000000e+00 : f32
    %15 = vector.broadcast %cst_14 : f32 to vector<1x10x4xf32>
    %c9 = arith.constant 9 : index
    %c0_15 = arith.constant 0 : index
    %c0_16 = arith.constant 0 : index
    %16 = vector.load %arg12[%c9, %c0_15, %c0_16] : memref<10x10x4xf32, #tpu.memory_space<vmem>>, vector<1x10x4xf32>
    tpu.vector_store %arg12[%c9, %c0_15, %c0_16], %15 {strides = array<i32>} : memref<10x10x4xf32, #tpu.memory_space<vmem>>, vector<1x10x4xf32>,
    %cst_17 = arith.constant 0.000000e+00 : f32
    %17 = vector.broadcast %cst_17 : f32 to vector<10x1x4xf32>
    %c0_18 = arith.constant 0 : index
    %c0_19 = arith.constant 0 : index
    %c0_20 = arith.constant 0 : index
    %18 = vector.load %arg12[%c0_18, %c0_19, %c0_20] : memref<10x10x4xf32, #tpu.memory_space<vmem>>, vector<10x1x4xf32>
    tpu.vector_store %arg12[%c0_18, %c0_19, %c0_20], %17 {strides = array<i32>} : memref<10x10x4xf32, #tpu.memory_space<vmem>>, vector<10x1x4xf32>,
    %cst_21 = arith.constant 0.000000e+00 : f32
    %19 = vector.broadcast %cst_21 : f32 to vector<10x1x4xf32>
    %c0_22 = arith.constant 0 : index
    %c9_23 = arith.constant 9 : index
    %c0_24 = arith.constant 0 : index
    %20 = vector.load %arg12[%c0_22, %c9_23, %c0_24] : memref<10x10x4xf32, #tpu.memory_space<vmem>>, vector<10x1x4xf32>
    tpu.vector_store %arg12[%c0_22, %c9_23, %c0_24], %19 {strides = array<i32>} : memref<10x10x4xf32, #tpu.memory_space<vmem>>, vector<10x1x4xf32>,
    %21 = vector.shape_cast %12 : vector<64x4xf32> to vector<8x8x4xf32>
    %c1 = arith.constant 1 : index
    %c1_25 = arith.constant 1 : index
    %c0_26 = arith.constant 0 : index
    %22 = vector.load %arg12[%c1, %c1_25, %c0_26] : memref<10x10x4xf32, #tpu.memory_space<vmem>>, vector<8x8x4xf32>
    tpu.vector_store %arg12[%c1, %c1_25, %c0_26], %21 {strides = array<i32>} : memref<10x10x4xf32, #tpu.memory_space<vmem>>, vector<8x8x4xf32>,
    %c0_27 = arith.constant 0 : index
    %c0_28 = arith.constant 0 : index
    %c0_29 = arith.constant 0 : index
    %23 = vector.load %arg12[%c0_27, %c0_28, %c0_29] : memref<10x10x4xf32, #tpu.memory_space<vmem>>, vector<8x8x4xf32>
    %24 = vector.shape_cast %23 : vector<8x8x4xf32> to vector<64x4xf32>
    %c0_30 = arith.constant 0 : index
    %c0_31 = arith.constant 0 : index
    %25 = vector.load %arg13[%c0_30, %c0_31] : memref<64x36xf32, #tpu.memory_space<vmem>>, vector<64x4xf32>
    tpu.vector_store %arg13[%c0_30, %c0_31], %24 {strides = array<i32>} : memref<64x36xf32, #tpu.memory_space<vmem>>, vector<64x4xf32>,
    %c0_32 = arith.constant 0 : index
    %c1_33 = arith.constant 1 : index
    %c0_34 = arith.constant 0 : index
    %26 = vector.load %arg12[%c0_32, %c1_33, %c0_34] : memref<10x10x4xf32, #tpu.memory_space<vmem>>, vector<8x8x4xf32>
    %27 = vector.shape_cast %26 : vector<8x8x4xf32> to vector<64x4xf32>
    %c0_35 = arith.constant 0 : index
    %c4 = arith.constant 4 : index
    %28 = vector.load %arg13[%c0_35, %c4] : memref<64x36xf32, #tpu.memory_space<vmem>>, vector<64x4xf32>
    tpu.vector_store %arg13[%c0_35, %c4], %27 {strides = array<i32>} : memref<64x36xf32, #tpu.memory_space<vmem>>, vector<64x4xf32>,
    %c0_36 = arith.constant 0 : index
    %c2 = arith.constant 2 : index
    %c0_37 = arith.constant 0 : index
    %29 = vector.load %arg12[%c0_36, %c2, %c0_37] : memref<10x10x4xf32, #tpu.memory_space<vmem>>, vector<8x8x4xf32>
    %30 = vector.shape_cast %29 : vector<8x8x4xf32> to vector<64x4xf32>
    %c0_38 = arith.constant 0 : index
    %c8 = arith.constant 8 : index
    %31 = vector.load %arg13[%c0_38, %c8] : memref<64x36xf32, #tpu.memory_space<vmem>>, vector<64x4xf32>
    tpu.vector_store %arg13[%c0_38, %c8], %30 {strides = array<i32>} : memref<64x36xf32, #tpu.memory_space<vmem>>, vector<64x4xf32>,
    %c1_39 = arith.constant 1 : index
    %c0_40 = arith.constant 0 : index
    %c0_41 = arith.constant 0 : index
    %32 = vector.load %arg12[%c1_39, %c0_40, %c0_41] : memref<10x10x4xf32, #tpu.memory_space<vmem>>, vector<8x8x4xf32>
    %33 = vector.shape_cast %32 : vector<8x8x4xf32> to vector<64x4xf32>
    %c0_42 = arith.constant 0 : index
    %c12 = arith.constant 12 : index
    %34 = vector.load %arg13[%c0_42, %c12] : memref<64x36xf32, #tpu.memory_space<vmem>>, vector<64x4xf32>
    tpu.vector_store %arg13[%c0_42, %c12], %33 {strides = array<i32>} : memref<64x36xf32, #tpu.memory_space<vmem>>, vector<64x4xf32>,
    %c1_43 = arith.constant 1 : index
    %c1_44 = arith.constant 1 : index
    %c0_45 = arith.constant 0 : index
    %35 = vector.load %arg12[%c1_43, %c1_44, %c0_45] : memref<10x10x4xf32, #tpu.memory_space<vmem>>, vector<8x8x4xf32>
    %36 = vector.shape_cast %35 : vector<8x8x4xf32> to vector<64x4xf32>
    %c0_46 = arith.constant 0 : index
    %c16 = arith.constant 16 : index
    %37 = vector.load %arg13[%c0_46, %c16] : memref<64x36xf32, #tpu.memory_space<vmem>>, vector<64x4xf32>
    tpu.vector_store %arg13[%c0_46, %c16], %36 {strides = array<i32>} : memref<64x36xf32, #tpu.memory_space<vmem>>, vector<64x4xf32>,
    %c1_47 = arith.constant 1 : index
    %c2_48 = arith.constant 2 : index
    %c0_49 = arith.constant 0 : index
    %38 = vector.load %arg12[%c1_47, %c2_48, %c0_49] : memref<10x10x4xf32, #tpu.memory_space<vmem>>, vector<8x8x4xf32>
    %39 = vector.shape_cast %38 : vector<8x8x4xf32> to vector<64x4xf32>
    %c0_50 = arith.constant 0 : index
    %c20 = arith.constant 20 : index
    %40 = vector.load %arg13[%c0_50, %c20] : memref<64x36xf32, #tpu.memory_space<vmem>>, vector<64x4xf32>
    tpu.vector_store %arg13[%c0_50, %c20], %39 {strides = array<i32>} : memref<64x36xf32, #tpu.memory_space<vmem>>, vector<64x4xf32>,
    %c2_51 = arith.constant 2 : index
    %c0_52 = arith.constant 0 : index
    %c0_53 = arith.constant 0 : index
    %41 = vector.load %arg12[%c2_51, %c0_52, %c0_53] : memref<10x10x4xf32, #tpu.memory_space<vmem>>, vector<8x8x4xf32>
    %42 = vector.shape_cast %41 : vector<8x8x4xf32> to vector<64x4xf32>
    %c0_54 = arith.constant 0 : index
    %c24 = arith.constant 24 : index
    %43 = vector.load %arg13[%c0_54, %c24] : memref<64x36xf32, #tpu.memory_space<vmem>>, vector<64x4xf32>
    tpu.vector_store %arg13[%c0_54, %c24], %42 {strides = array<i32>} : memref<64x36xf32, #tpu.memory_space<vmem>>, vector<64x4xf32>,
    %c2_55 = arith.constant 2 : index
    %c1_56 = arith.constant 1 : index
    %c0_57 = arith.constant 0 : index
    %44 = vector.load %arg12[%c2_55, %c1_56, %c0_57] : memref<10x10x4xf32, #tpu.memory_space<vmem>>, vector<8x8x4xf32>
    %45 = vector.shape_cast %44 : vector<8x8x4xf32> to vector<64x4xf32>
    %c0_58 = arith.constant 0 : index
    %c28 = arith.constant 28 : index
    %46 = vector.load %arg13[%c0_58, %c28] : memref<64x36xf32, #tpu.memory_space<vmem>>, vector<64x4xf32>
    tpu.vector_store %arg13[%c0_58, %c28], %45 {strides = array<i32>} : memref<64x36xf32, #tpu.memory_space<vmem>>, vector<64x4xf32>,
    %c2_59 = arith.constant 2 : index
    %c2_60 = arith.constant 2 : index
    %c0_61 = arith.constant 0 : index
    %47 = vector.load %arg12[%c2_59, %c2_60, %c0_61] : memref<10x10x4xf32, #tpu.memory_space<vmem>>, vector<8x8x4xf32>
    %48 = vector.shape_cast %47 : vector<8x8x4xf32> to vector<64x4xf32>
    %c0_62 = arith.constant 0 : index
    %c32 = arith.constant 32 : index
    %49 = vector.load %arg13[%c0_62, %c32] : memref<64x36xf32, #tpu.memory_space<vmem>>, vector<64x4xf32>
    tpu.vector_store %arg13[%c0_62, %c32], %48 {strides = array<i32>} : memref<64x36xf32, #tpu.memory_space<vmem>>, vector<64x4xf32>,
    %c0_63 = arith.constant 0 : index
    %c0_64 = arith.constant 0 : index
    %50 = vector.load %arg13[%c0_63, %c0_64] : memref<64x36xf32, #tpu.memory_space<vmem>>, vector<64x36xf32>
    %c0_65 = arith.constant 0 : index
    %c0_66 = arith.constant 0 : index
    %51 = vector.load %arg5[%c0_65, %c0_66] : memref<36x4xf32, #tpu.memory_space<vmem>>, vector<36x4xf32>
    %cst_67 = arith.constant dense<0.000000e+00> : vector<64x4xf32>
    %52 = tpu.matmul %50, %51, %cst_67 {dimension_numbers = #tpu.dot_dimension_numbers<[1], [0], [0], [1], [0, 0, 1, 1], [], []>} : vector<64x36xf32>, vector<36x4xf32>, vector<64x4xf32> -> vector<64x4xf32>
    %c0_68 = arith.constant 0 : index
    %c0_69 = arith.constant 0 : index
    %53 = vector.load %arg6[%c0_68, %c0_69] : memref<1x4xf32, #tpu.memory_space<vmem>>, vector<1x4xf32>
    %54 = vector.broadcast %53 : vector<1x4xf32> to vector<64x4xf32>
    %55 = arith.mulf %52, %54 : vector<64x4xf32>
    %c0_70 = arith.constant 0 : index
    %c0_71 = arith.constant 0 : index
    %56 = vector.load %arg7[%c0_70, %c0_71] : memref<1x4xf32, #tpu.memory_space<vmem>>, vector<1x4xf32>
    %57 = vector.broadcast %56 : vector<1x4xf32> to vector<64x4xf32>
    %58 = arith.addf %55, %57 : vector<64x4xf32>
    %cst_72 = arith.constant 0.000000e+00 : f32
    %59 = vector.broadcast %cst_72 : f32 to vector<64x4xf32>
    %60 = arith.maximumf %58, %59 : vector<64x4xf32>
    %c0_73 = arith.constant 0 : index
    %c0_74 = arith.constant 0 : index
    %61 = vector.load %arg8[%c0_73, %c0_74] : memref<4x16xf32, #tpu.memory_space<vmem>>, vector<4x16xf32>
    %cst_75 = arith.constant dense<0.000000e+00> : vector<64x16xf32>
    %62 = tpu.matmul %60, %61, %cst_75 {dimension_numbers = #tpu.dot_dimension_numbers<[1], [0], [0], [1], [0, 0, 1, 1], [], []>} : vector<64x4xf32>, vector<4x16xf32>, vector<64x16xf32> -> vector<64x16xf32>
    %c0_76 = arith.constant 0 : index
    %c0_77 = arith.constant 0 : index
    %63 = vector.load %arg9[%c0_76, %c0_77] : memref<1x16xf32, #tpu.memory_space<vmem>>, vector<1x16xf32>
    %64 = vector.broadcast %63 : vector<1x16xf32> to vector<64x16xf32>
    %65 = arith.mulf %62, %64 : vector<64x16xf32>
    %c0_78 = arith.constant 0 : index
    %c0_79 = arith.constant 0 : index
    %66 = vector.load %arg10[%c0_78, %c0_79] : memref<1x16xf32, #tpu.memory_space<vmem>>, vector<1x16xf32>
    %67 = vector.broadcast %66 : vector<1x16xf32> to vector<64x16xf32>
    %68 = arith.addf %65, %67 : vector<64x16xf32>
    %69 = arith.addf %68, %2 : vector<64x16xf32>
    %cst_80 = arith.constant 0.000000e+00 : f32
    %70 = vector.broadcast %cst_80 : f32 to vector<64x16xf32>
    %71 = arith.maximumf %69, %70 : vector<64x16xf32>
    %72 = vector.shape_cast %71 : vector<64x16xf32> to vector<8x8x16xf32>
    %c0_81 = arith.constant 0 : index
    %c0_82 = arith.constant 0 : index
    %c0_83 = arith.constant 0 : index
    %c0_84 = arith.constant 0 : index
    %73 = vector.load %arg11[%c0_81, %c0_82, %c0_83, %c0_84] : memref<1x8x8x16xf32, #tpu.memory_space<vmem>>, vector<1x8x8x16xf32>
    %74 = vector.shape_cast %73 : vector<1x8x8x16xf32> to vector<8x8x16xf32>
    %75 = vector.shape_cast %72 : vector<8x8x16xf32> to vector<1x8x8x16xf32>
    tpu.vector_store %arg11[%c0_81, %c0_82, %c0_83, %c0_84], %75 {strides = array<i32>} : memref<1x8x8x16xf32, #tpu.memory_space<vmem>>, vector<1x8x8x16xf32>,
    return
  }
  func.func @transform_0(%arg0: i32) -> (i32, i32, i32, i32) {
    %c0_i32 = arith.constant 0 : i32
    %c0_i32_0 = arith.constant 0 : i32
    %c0_i32_1 = arith.constant 0 : i32
    %c0_i32_2 = arith.constant 0 : i32
    return %arg0, %c0_i32, %c0_i32_0, %c0_i32_1 : i32, i32, i32, i32
  }
  func.func @transform_1(%arg0: i32) -> (i32, i32) {
    %c0_i32 = arith.constant 0 : i32
    %c0_i32_0 = arith.constant 0 : i32
    %c0_i32_1 = arith.constant 0 : i32
    return %c0_i32, %c0_i32_0 : i32, i32
  }
  func.func @transform_2(%arg0: i32) -> (i32, i32) {
    %c0_i32 = arith.constant 0 : i32
    %c0_i32_0 = arith.constant 0 : i32
    %c0_i32_1 = arith.constant 0 : i32
    return %c0_i32, %c0_i32_0 : i32, i32
  }
  func.func @transform_3(%arg0: i32) -> (i32, i32) {
    %c0_i32 = arith.constant 0 : i32
    %c0_i32_0 = arith.constant 0 : i32
    %c0_i32_1 = arith.constant 0 : i32
    return %c0_i32, %c0_i32_0 : i32, i32
  }
  func.func @transform_4(%arg0: i32) -> (i32, i32) {
    %c0_i32 = arith.constant 0 : i32
    %c0_i32_0 = arith.constant 0 : i32
    %c0_i32_1 = arith.constant 0 : i32
    return %c0_i32, %c0_i32_0 : i32, i32
  }
  func.func @transform_5(%arg0: i32) -> (i32, i32) {
    %c0_i32 = arith.constant 0 : i32
    %c0_i32_0 = arith.constant 0 : i32
    %c0_i32_1 = arith.constant 0 : i32
    return %c0_i32, %c0_i32_0 : i32, i32
  }
  func.func @transform_6(%arg0: i32) -> (i32, i32) {
    %c0_i32 = arith.constant 0 : i32
    %c0_i32_0 = arith.constant 0 : i32
    %c0_i32_1 = arith.constant 0 : i32
    return %c0_i32, %c0_i32_0 : i32, i32
  }
  func.func @transform_7(%arg0: i32) -> (i32, i32) {
    %c0_i32 = arith.constant 0 : i32
    %c0_i32_0 = arith.constant 0 : i32
    %c0_i32_1 = arith.constant 0 : i32
    return %c0_i32, %c0_i32_0 : i32, i32
  }
  func.func @transform_8(%arg0: i32) -> (i32, i32) {
    %c0_i32 = arith.constant 0 : i32
    %c0_i32_0 = arith.constant 0 : i32
    %c0_i32_1 = arith.constant 0 : i32
    return %c0_i32, %c0_i32_0 : i32, i32
  }
  func.func @transform_9(%arg0: i32) -> (i32, i32) {
    %c0_i32 = arith.constant 0 : i32
    %c0_i32_0 = arith.constant 0 : i32
    %c0_i32_1 = arith.constant 0 : i32
    return %c0_i32, %c0_i32_0 : i32, i32
  }
  func.func @transform_10(%arg0: i32) -> (i32, i32, i32, i32) {
    %c0_i32 = arith.constant 0 : i32
    %c0_i32_0 = arith.constant 0 : i32
    %c0_i32_1 = arith.constant 0 : i32
    %c0_i32_2 = arith.constant 0 : i32
    return %arg0, %c0_i32, %c0_i32_0, %c0_i32_1 : i32, i32, i32, i32
  }
}

</mosaic_0001>

<llo_original>
// kernel: tpu_custom_call.1
$region0: #{tpu_custom_call.1}
  #allocation0 [shape = 'u32[]', space=smem, size = 0x4, offset = 0x4, fixed_abs, tag = 'smem constant byte address 0x4 - core index']
  #allocation1 [shape = 'u32[72,128]{1,0:T(1,128)}', space=vmem, size = 0x9000, scoped, tag = 'internal scratch']
  #allocation2 [shape = 'f32[10,10,4]{2,1,0:T(8,128)}', space=vmem, size = 0x14000, scoped, tag = 'scratch operand']
  #allocation3 [shape = 'f32[64,36]{1,0:T(8,128)}', space=vmem, size = 0x8000, scoped, tag = 'scratch operand']
  %s0 = inlined_call_operand.hbm [shape: f32[2,8,8,16], index: 0, kind: input, shape index: {}]
  %s1 = inlined_call_operand.vmem [shape: f32[16,4], index: 1, kind: input, shape index: {}]
  %s2 = inlined_call_operand.vmem [shape: f32[1,4], index: 2, kind: input, shape index: {}]
  %s3 = inlined_call_operand.vmem [shape: f32[1,4], index: 3, kind: input, shape index: {}]
  %s4 = inlined_call_operand.vmem [shape: f32[36,4], index: 4, kind: input, shape index: {}]
  %s5 = inlined_call_operand.vmem [shape: f32[1,4], index: 5, kind: input, shape index: {}]
  %s6 = inlined_call_operand.vmem [shape: f32[1,4], index: 6, kind: input, shape index: {}]
  %s7 = inlined_call_operand.vmem [shape: f32[4,16], index: 7, kind: input, shape index: {}]
  %s8 = inlined_call_operand.vmem [shape: f32[1,16], index: 8, kind: input, shape index: {}]
  %s9 = inlined_call_operand.vmem [shape: f32[1,16], index: 9, kind: input, shape index: {}]
  %s10 = inlined_call_operand.hbm [shape: f32[2,8,8,16], index: 10, kind: output, shape index: {}]
  %s11 = sld [smem:[#allocation0]]
  $region77: #{tpu_custom_call.1} parent=0
    _
  %s13 = ssub.s32 1, %s11
  %s14 = scalar_select 0, %s13, %s11
  $region1: #{tpu_custom_call.1} parent=0
    #allocation4 [shape = 'u8[65536]{0}', space=vmem, size = 0x10000, scoped, tag = 'input window, operand 0']
    #allocation5 [shape = 's32[2]{0}', space=sflag, size = 0x8, scoped, tag = 'scoped memory for tpu_custom_call.1']
    #allocation6 [shape = 's32[2]{0}', space=sflag, size = 0x8, scoped, tag = 'scoped memory for tpu_custom_call.1']
    #allocation7 [shape = 'u8[65536]{0}', space=vmem, size = 0x10000, scoped, tag = 'output window, operand 0']
    %15 = vsyncpa [#allocation5], 0
    %s16 = scalar_lea.sflag [#allocation5], 1
    %17 = vsyncpa %s16, 0
    %18 = vsyncpa [#allocation6], 0
    %s19 = scalar_lea.sflag [#allocation6], 1
    %20 = vsyncpa %s19, 0
    loop: start=0, step=1, limit=4
    $region2: #{tpu_custom_call.1} parent=1 // loop_pre_header
      _
    $region3: #{tpu_custom_call.1} parent=1 // loop_header
      %s22 = sphi 0, %s26
      %p23 = scmp.ge.s32.totalorder %s22, 4
      %s32 = sphi 0, %s34
      %s35 = sphi 0, %s32
      %s36 = sphi 0, %s35
      %s52 = sphi 0, %s36
      %s56 = sphi 0, %s56
      %s58 = sphi 0, %s56
      %s59 = sphi 0, %s58
      %s73 = sphi 0, %s59
      %s77 = sphi 0, %s77
      %s79 = sphi 0, %s77
      %s80 = sphi 0, %s79
      %s94 = sphi 0, %s80
      %s98 = sphi 0, %s98
      %s100 = sphi 0, %s98
      %s101 = sphi 0, %s100
      %s115 = sphi 0, %s101
      %s119 = sphi 0, %s119
      %s121 = sphi 0, %s119
      %s122 = sphi 0, %s121
      %s136 = sphi 0, %s122
      %s140 = sphi 0, %s140
      %s142 = sphi 0, %s140
      %s143 = sphi 0, %s142
      %s157 = sphi 0, %s143
      %s161 = sphi 0, %s161
      %s163 = sphi 0, %s161
      %s164 = sphi 0, %s163
      %s178 = sphi 0, %s164
      %s182 = sphi 0, %s182
      %s184 = sphi 0, %s182
      %s185 = sphi 0, %s184
      %s199 = sphi 0, %s185
      %s203 = sphi 0, %s203
      %s205 = sphi 0, %s203
      %s206 = sphi 0, %s205
      %s220 = sphi 0, %s206
      %s224 = sphi 0, %s224
      %s226 = sphi 0, %s224
      %s227 = sphi 0, %s226
      %s241 = sphi 0, %s227
      %s247 = sphi 0, %s249
      %s250 = sphi 0, %s247
      %s251 = sphi 0, %s250
      %s267 = sphi 0, %s251
    $region4: #{tpu_custom_call.1} parent=1 // loop_header_branch
      %25 = sbr.rel (%p23) target = $region8
    $region5: #{tpu_custom_call.1} parent=1 // loop_body
      %s27 = ssub.s32 %s22, 1
      %s28 = ssub.s32 %s22, 2
      %s29 = sadd.s32 %s22, 1
      %s30 = ssub.s32 %s22, %s29
      %p31 = scmp.eq.s32.totalorder %s30, 0
      %s33 = sadd.s32 %s32, 1
      %s34 = scalar_select %p31, %s32, %s33
      %p37 = pneg %p31
      %p38 = scmp.eq.s32.totalorder %s22, 1
      %p39 = por %p37, %p38
      %p40 = scmp.ne.s32.totalorder %s32, %s35
      %p41 = scmp.eq.s32.totalorder %s22, 0
      %p42 = por %p40, %p41
      %p43 = scmp.ne.s32.totalorder %s32, %s35
      %p44 = scmp.eq.s32.totalorder %s27, 1
      %p45 = por %p43, %p44
      %p46 = scmp.ne.s32.totalorder %s35, %s36
      %p47 = scmp.eq.s32.totalorder %s27, 0
      %p48 = por %p46, %p47
      %p49 = scmp.ne.s32.totalorder %s35, %s36
      %p50 = scmp.eq.s32.totalorder %s28, 1
      %p51 = por %p49, %p50
      %p53 = scmp.ne.s32.totalorder %s36, %s52
      %p54 = scmp.eq.s32.totalorder %s28, 0
      %p55 = por %p53, %p54
      %s57 = sadd.s32 %s56, 1
      %p60 = scmp.eq.s32.totalorder %s22, 1
      %p61 = scmp.ne.s32.totalorder %s56, %s58
      %p62 = scmp.eq.s32.totalorder %s22, 0
      %p63 = por %p61, %p62
      %p64 = scmp.ne.s32.totalorder %s56, %s58
      %p65 = scmp.eq.s32.totalorder %s27, 1
      %p66 = por %p64, %p65
      %p67 = scmp.ne.s32.totalorder %s58, %s59
      %p68 = scmp.eq.s32.totalorder %s27, 0
      %p69 = por %p67, %p68
      %p70 = scmp.ne.s32.totalorder %s58, %s59
      %p71 = scmp.eq.s32.totalorder %s28, 1
      %p72 = por %p70, %p71
      %p74 = scmp.ne.s32.totalorder %s59, %s73
      %p75 = scmp.eq.s32.totalorder %s28, 0
      %p76 = por %p74, %p75
      %s78 = sadd.s32 %s77, 1
      %p81 = scmp.eq.s32.totalorder %s22, 1
      %p82 = scmp.ne.s32.totalorder %s77, %s79
      %p83 = scmp.eq.s32.totalorder %s22, 0
      %p84 = por %p82, %p83
      %p85 = scmp.ne.s32.totalorder %s77, %s79
      %p86 = scmp.eq.s32.totalorder %s27, 1
      %p87 = por %p85, %p86
      %p88 = scmp.ne.s32.totalorder %s79, %s80
      %p89 = scmp.eq.s32.totalorder %s27, 0
      %p90 = por %p88, %p89
      %p91 = scmp.ne.s32.totalorder %s79, %s80
      %p92 = scmp.eq.s32.totalorder %s28, 1
      %p93 = por %p91, %p92
      %p95 = scmp.ne.s32.totalorder %s80, %s94
      %p96 = scmp.eq.s32.totalorder %s28, 0
      %p97 = por %p95, %p96
      %s99 = sadd.s32 %s98, 1
      %p102 = scmp.eq.s32.totalorder %s22, 1
      %p103 = scmp.ne.s32.totalorder %s98, %s100
      %p104 = scmp.eq.s32.totalorder %s22, 0
      %p105 = por %p103, %p104
      %p106 = scmp.ne.s32.totalorder %s98, %s100
      %p107 = scmp.eq.s32.totalorder %s27, 1
      %p108 = por %p106, %p107
      %p109 = scmp.ne.s32.totalorder %s100, %s101
      %p110 = scmp.eq.s32.totalorder %s27, 0
      %p111 = por %p109, %p110
      %p112 = scmp.ne.s32.totalorder %s100, %s101
      %p113 = scmp.eq.s32.totalorder %s28, 1
      %p114 = por %p112, %p113
      %p116 = scmp.ne.s32.totalorder %s101, %s115
      %p117 = scmp.eq.s32.totalorder %s28, 0
      %p118 = por %p116, %p117
      %s120 = sadd.s32 %s119, 1
      %p123 = scmp.eq.s32.totalorder %s22, 1
      %p124 = scmp.ne.s32.totalorder %s119, %s121
      %p125 = scmp.eq.s32.totalorder %s22, 0
      %p126 = por %p124, %p125
      %p127 = scmp.ne.s32.totalorder %s119, %s121
      %p128 = scmp.eq.s32.totalorder %s27, 1
      %p129 = por %p127, %p128
      %p130 = scmp.ne.s32.totalorder %s121, %s122
      %p131 = scmp.eq.s32.totalorder %s27, 0
      %p132 = por %p130, %p131
      %p133 = scmp.ne.s32.totalorder %s121, %s122
      %p134 = scmp.eq.s32.totalorder %s28, 1
      %p135 = por %p133, %p134
      %p137 = scmp.ne.s32.totalorder %s122, %s136
      %p138 = scmp.eq.s32.totalorder %s28, 0
      %p139 = por %p137, %p138
      %s141 = sadd.s32 %s140, 1
      %p144 = scmp.eq.s32.totalorder %s22, 1
      %p145 = scmp.ne.s32.totalorder %s140, %s142
      %p146 = scmp.eq.s32.totalorder %s22, 0
      %p147 = por %p145, %p146
      %p148 = scmp.ne.s32.totalorder %s140, %s142
      %p149 = scmp.eq.s32.totalorder %s27, 1
      %p150 = por %p148, %p149
      %p151 = scmp.ne.s32.totalorder %s142, %s143
      %p152 = scmp.eq.s32.totalorder %s27, 0
      %p153 = por %p151, %p152
      %p154 = scmp.ne.s32.totalorder %s142, %s143
      %p155 = scmp.eq.s32.totalorder %s28, 1
      %p156 = por %p154, %p155
      %p158 = scmp.ne.s32.totalorder %s143, %s157
      %p159 = scmp.eq.s32.totalorder %s28, 0
      %p160 = por %p158, %p159
      %s162 = sadd.s32 %s161, 1
      %p165 = scmp.eq.s32.totalorder %s22, 1
      %p166 = scmp.ne.s32.totalorder %s161, %s163
      %p167 = scmp.eq.s32.totalorder %s22, 0
      %p168 = por %p166, %p167
      %p169 = scmp.ne.s32.totalorder %s161, %s163
      %p170 = scmp.eq.s32.totalorder %s27, 1
      %p171 = por %p169, %p170
      %p172 = scmp.ne.s32.totalorder %s163, %s164
      %p173 = scmp.eq.s32.totalorder %s27, 0
      %p174 = por %p172, %p173
      %p175 = scmp.ne.s32.totalorder %s163, %s164
      %p176 = scmp.eq.s32.totalorder %s28, 1
      %p177 = por %p175, %p176
      %p179 = scmp.ne.s32.totalorder %s164, %s178
      %p180 = scmp.eq.s32.totalorder %s28, 0
      %p181 = por %p179, %p180
      %s183 = sadd.s32 %s182, 1
      %p186 = scmp.eq.s32.totalorder %s22, 1
      %p187 = scmp.ne.s32.totalorder %s182, %s184
      %p188 = scmp.eq.s32.totalorder %s22, 0
      %p189 = por %p187, %p188
      %p190 = scmp.ne.s32.totalorder %s182, %s184
      %p191 = scmp.eq.s32.totalorder %s27, 1
      %p192 = por %p190, %p191
      %p193 = scmp.ne.s32.totalorder %s184, %s185
      %p194 = scmp.eq.s32.totalorder %s27, 0
      %p195 = por %p193, %p194
      %p196 = scmp.ne.s32.totalorder %s184, %s185
      %p197 = scmp.eq.s32.totalorder %s28, 1
      %p198 = por %p196, %p197
      %p200 = scmp.ne.s32.totalorder %s185, %s199
      %p201 = scmp.eq.s32.totalorder %s28, 0
      %p202 = por %p200, %p201
      %s204 = sadd.s32 %s203, 1
      %p207 = scmp.eq.s32.totalorder %s22, 1
      %p208 = scmp.ne.s32.totalorder %s203, %s205
      %p209 = scmp.eq.s32.totalorder %s22, 0
      %p210 = por %p208, %p209
      %p211 = scmp.ne.s32.totalorder %s203, %s205
      %p212 = scmp.eq.s32.totalorder %s27, 1
      %p213 = por %p211, %p212
      %p214 = scmp.ne.s32.totalorder %s205, %s206
      %p215 = scmp.eq.s32.totalorder %s27, 0
      %p216 = por %p214, %p215
      %p217 = scmp.ne.s32.totalorder %s205, %s206
      %p218 = scmp.eq.s32.totalorder %s28, 1
      %p219 = por %p217, %p218
      %p221 = scmp.ne.s32.totalorder %s206, %s220
      %p222 = scmp.eq.s32.totalorder %s28, 0
      %p223 = por %p221, %p222
      %s225 = sadd.s32 %s224, 1
      %p228 = scmp.eq.s32.totalorder %s22, 1
      %p229 = scmp.ne.s32.totalorder %s224, %s226
      %p230 = scmp.eq.s32.totalorder %s22, 0
      %p231 = por %p229, %p230
      %p232 = scmp.ne.s32.totalorder %s224, %s226
      %p233 = scmp.eq.s32.totalorder %s27, 1
      %p234 = por %p232, %p233
      %p235 = scmp.ne.s32.totalorder %s226, %s227
      %p236 = scmp.eq.s32.totalorder %s27, 0
      %p237 = por %p235, %p236
      %p238 = scmp.ne.s32.totalorder %s226, %s227
      %p239 = scmp.eq.s32.totalorder %s28, 1
      %p240 = por %p238, %p239
      %p242 = scmp.ne.s32.totalorder %s227, %s241
      %p243 = scmp.eq.s32.totalorder %s28, 0
      %p244 = por %p242, %p243
      %s245 = ssub.s32 %s22, %s29
      %p246 = scmp.eq.s32.totalorder %s245, 0
      %s248 = sadd.s32 %s247, 1
      %s249 = scalar_select %p246, %s247, %s248
      %p252 = pneg %p246
      %p253 = scmp.eq.s32.totalorder %s22, 1
      %p254 = por %p252, %p253
      %p255 = scmp.ne.s32.totalorder %s247, %s250
      %p256 = scmp.eq.s32.totalorder %s22, 0
      %p257 = por %p255, %p256
      %p258 = scmp.ne.s32.totalorder %s247, %s250
      %p259 = scmp.eq.s32.totalorder %s27, 1
      %p260 = por %p258, %p259
      %p261 = scmp.ne.s32.totalorder %s250, %s251
      %p262 = scmp.eq.s32.totalorder %s27, 0
      %p263 = por %p261, %p262
      %p264 = scmp.ne.s32.totalorder %s250, %s251
      %p265 = scmp.eq.s32.totalorder %s28, 1
      %p266 = por %p264, %p265
      %p268 = scmp.ne.s32.totalorder %s251, %s267
      %p269 = scmp.eq.s32.totalorder %s28, 0
      %p270 = por %p268, %p269
      %p271 = scmp.le.s32.totalorder 1, %s22
      %p272 = scmp.lt.s32.totalorder %s22, 3
      %p273 = pnand %p271, %p272
      %p274 = pneg %p273
      // Predicated region
      $region9: #{tpu_custom_call.1} parent=5 // pred_check
        _
      $region10: #{tpu_custom_call.1} parent=5 // pred_check_branch
        %276 = sbr.rel (%p273) target = $region12
      $region11: #{tpu_custom_call.1} parent=5 // pred_region
        %s277 = ssub.s32 %s22, 1
        // Predicated region
        $region13: #{tpu_custom_call.1} parent=11 // pred_check
          %p278 = pneg %p69
        $region14: #{tpu_custom_call.1} parent=11 // pred_check_branch
          %280 = sbr.rel (%p278) target = $region16
        $region15: #{tpu_custom_call.1} parent=11 // pred_region
          _
        $region16: #{tpu_custom_call.1} parent=11 // pred_fallthru
          _
        // Predicated region
        $region17: #{tpu_custom_call.1} parent=11 // pred_check
          %p281 = pneg %p90
        $region18: #{tpu_custom_call.1} parent=11 // pred_check_branch
          %283 = sbr.rel (%p281) target = $region20
        $region19: #{tpu_custom_call.1} parent=11 // pred_region
          _
        $region20: #{tpu_custom_call.1} parent=11 // pred_fallthru
          _
        // Predicated region
        $region21: #{tpu_custom_call.1} parent=11 // pred_check
          %p284 = pneg %p111
        $region22: #{tpu_custom_call.1} parent=11 // pred_check_branch
          %286 = sbr.rel (%p284) target = $region24
        $region23: #{tpu_custom_call.1} parent=11 // pred_region
          _
        $region24: #{tpu_custom_call.1} parent=11 // pred_fallthru
          _
        // Predicated region
        $region25: #{tpu_custom_call.1} parent=11 // pred_check
          %p287 = pneg %p132
        $region26: #{tpu_custom_call.1} parent=11 // pred_check_branch
          %289 = sbr.rel (%p287) target = $region28
        $region27: #{tpu_custom_call.1} parent=11 // pred_region
          _
        $region28: #{tpu_custom_call.1} parent=11 // pred_fallthru
          _
        // Predicated region
        $region29: #{tpu_custom_call.1} parent=11 // pred_check
          %p290 = pneg %p153
        $region30: #{tpu_custom_call.1} parent=11 // pred_check_branch
          %292 = sbr.rel (%p290) target = $region32
        $region31: #{tpu_custom_call.1} parent=11 // pred_region
          _
        $region32: #{tpu_custom_call.1} parent=11 // pred_fallthru
          _
        // Predicated region
        $region33: #{tpu_custom_call.1} parent=11 // pred_check
          %p293 = pneg %p174
        $region34: #{tpu_custom_call.1} parent=11 // pred_check_branch
          %295 = sbr.rel (%p293) target = $region36
        $region35: #{tpu_custom_call.1} parent=11 // pred_region
          _
        $region36: #{tpu_custom_call.1} parent=11 // pred_fallthru
          _
        // Predicated region
        $region37: #{tpu_custom_call.1} parent=11 // pred_check
          %p296 = pneg %p195
        $region38: #{tpu_custom_call.1} parent=11 // pred_check_branch
          %298 = sbr.rel (%p296) target = $region40
        $region39: #{tpu_custom_call.1} parent=11 // pred_region
          _
        $region40: #{tpu_custom_call.1} parent=11 // pred_fallthru
          _
        // Predicated region
        $region41: #{tpu_custom_call.1} parent=11 // pred_check
          %p299 = pneg %p216
        $region42: #{tpu_custom_call.1} parent=11 // pred_check_branch
          %301 = sbr.rel (%p299) target = $region44
        $region43: #{tpu_custom_call.1} parent=11 // pred_region
          _
        $region44: #{tpu_custom_call.1} parent=11 // pred_fallthru
          _
        // Predicated region
        $region45: #{tpu_custom_call.1} parent=11 // pred_check
          %p302 = pneg %p237
        $region46: #{tpu_custom_call.1} parent=11 // pred_check_branch
          %304 = sbr.rel (%p302) target = $region48
        $region47: #{tpu_custom_call.1} parent=11 // pred_region
          _
        $region48: #{tpu_custom_call.1} parent=11 // pred_fallthru
          _
      $region12: #{tpu_custom_call.1} parent=5 // pred_fallthru
        _
      %p305 = scmp.lt.s32.totalorder %s22, 2
      // Predicated region
      $region49: #{tpu_custom_call.1} parent=5 // pred_check
        %p306 = pneg %p305
      $region50: #{tpu_custom_call.1} parent=5 // pred_check_branch
        %308 = sbr.rel (%p306) target = $region52
      $region51: #{tpu_custom_call.1} parent=5 // pred_region
        // Predicated region
        $region53: #{tpu_custom_call.1} parent=51 // pred_check
          %p309 = pneg %p42
        $region54: #{tpu_custom_call.1} parent=51 // pred_check_branch
          %311 = sbr.rel (%p309) target = $region56
        $region55: #{tpu_custom_call.1} parent=51 // pred_region
          %s312 = sand.u32 %s32, 1
          %s313 = scalar_lea.sflag [#allocation5], %s312
          %s314 = sand.u32 %s32, 1
          %s315 = smul.addr %s314, 64
          %s316 = scalar_lea.vmem [#allocation4], %s315
          %318 = vsyncadd %s313, 0
          %s319 = smul.addr %s22, 8
          %s320 = smul.addr %s319, 8
          %s321 = scalar_lea.hbm %s0, %s320
          %s322 = sshll.u32 %s321, 4
          %s323 = int_to_ptr.hbm [resolvable:$true] %s322
          %s324 = sshll.u32 %s316, 4
          %s325 = int_to_ptr.vmem [resolvable:$true] %s324
          %330 = dma.hbm_to_vmem [thread:$0]  %s323, 1024, %s325, %s313, 128, 128, 8
        $region56: #{tpu_custom_call.1} parent=51 // pred_fallthru
          _
      $region52: #{tpu_custom_call.1} parent=5 // pred_fallthru
        _
      %p331 = scmp.le.s32.totalorder 1, %s22
      %p332 = scmp.lt.s32.totalorder %s22, 3
      %p333 = pnand %p331, %p332
      %p334 = pneg %p333
      // Predicated region
      $region57: #{tpu_custom_call.1} parent=5 // pred_check
        _
      $region58: #{tpu_custom_call.1} parent=5 // pred_check_branch
        %336 = sbr.rel (%p333) target = $region60
      $region59: #{tpu_custom_call.1} parent=5 // pred_region
        %s337 = ssub.s32 %s22, 1
        %s338 = sand.u32 %s35, 1
        %s339 = scalar_lea.sflag [#allocation5], %s338
        %s340 = sand.u32 %s35, 1
        %s341 = smul.addr %s340, 64
        %s342 = scalar_lea.vmem [#allocation4], %s341
        // Predicated region
        $region61: #{tpu_custom_call.1} parent=59 // pred_check
          %p343 = pneg %p48
        $region62: #{tpu_custom_call.1} parent=59 // pred_check_branch
          %345 = sbr.rel (%p343) target = $region64
        $region63: #{tpu_custom_call.1} parent=59 // pred_region
          %347 = dma.done %s339, 1024
        $region64: #{tpu_custom_call.1} parent=59 // pred_fallthru
          _
        %s348 = sand.u32 %s35, 1
        %s349 = scalar_lea.sflag [#allocation5], %s348
        %s350 = sand.u32 %s35, 1
        %s351 = smul.addr %s350, 64
        %s352 = scalar_lea.vmem [#allocation4], %s351
        %p353 = pneg %p48
        %p354 = pneg %p45
        %p355 = pneg %p69
        %p356 = pneg %p66
        %p357 = pneg %p90
        %p358 = pneg %p87
        %p359 = pneg %p111
        %p360 = pneg %p108
        %p361 = pneg %p132
        %p362 = pneg %p129
        %p363 = pneg %p153
        %p364 = pneg %p150
        %p365 = pneg %p174
        %p366 = pneg %p171
        %p367 = pneg %p195
        %p368 = pneg %p192
        %p369 = pneg %p216
        %p370 = pneg %p213
        %p371 = pneg %p237
        %p372 = pneg %p234
        %p373 = pneg %p263
        %p374 = pneg %p260
        %s375 = sand.u32 %s250, 1
        %s376 = scalar_lea.sflag [#allocation6], %s375
        %s377 = sand.u32 %s250, 1
        %s378 = smul.addr %s377, 64
        %s379 = scalar_lea.vmem [#allocation7], %s378
        %v380 = vld [vmem:[%s342] sm:$0xff]
        %v381 = vld [vmem:[%s342 + $0x8] sm:$0xff]
        %v382 = vld [vmem:[%s342 + $0x10] sm:$0xff]
        %v383 = vld [vmem:[%s342 + $0x18] sm:$0xff]
        %v384 = vld [vmem:[%s342 + $0x20] sm:$0xff]
        %v385 = vld [vmem:[%s342 + $0x28] sm:$0xff]
        %v386 = vld [vmem:[%s342 + $0x30] sm:$0xff]
        %v387 = vld [vmem:[%s342 + $0x38] sm:$0xff]
        %v388 = vld [vmem:[%s1] sm:$0xff]
        %v389 = vld [vmem:[%s1 + $0x8] sm:$0xff]
        %vm390 = vcmask 130048
        %v392 = vsel %vm390, %v380, 0
        %v395 = vsel %vm390, %v381, 0
        %v398 = vsel %vm390, %v382, 0
        %v401 = vsel %vm390, %v383, 0
        %v404 = vsel %vm390, %v384, 0
        %v407 = vsel %vm390, %v385, 0
        %v410 = vsel %vm390, %v386, 0
        %v413 = vsel %vm390, %v387, 0
        %415 = vmatpush.msra.mxu0 0.0
        %416 = vmatpush.msra.mxu0 0.0
        %417 = vmatpush.msra.mxu0 0.0
        %418 = vmatpush.msra.mxu0 0.0
        %419 = vmatpush.msra.mxu0 0.0
        %420 = vmatpush.msra.mxu0 0.0
        %421 = vmatpush.msra.mxu0 0.0
        %422 = vmatpush.msra.mxu0 0.0
        %423 = vmatpush.msra.mxu0 0.0
        %424 = vmatpush.msra.mxu0 0.0
        %425 = vmatpush.msra.mxu0 0.0
        %426 = vmatpush.msra.mxu0 0.0
        %427 = vmatpush.msra.mxu0 0.0
        %428 = vmatpush.msra.mxu0 0.0
        %429 = vmatpush.msra.mxu0 %v389
        %430 = vmatpush.msra.mxu0 %v388
        %431 = vmatmul.f32.gmra.mxu0 %v392
        %v432 = vpop.f32.mrf.mxu0
        %v433 = vadd.f32 0.0, %v432
        %434 = vmatmul.f32.gmra.mxu0 %v395
        %v435 = vpop.f32.mrf.mxu0
        %v436 = vadd.f32 0.0, %v435
        %437 = vmatmul.f32.gmra.mxu0 %v398
        %v438 = vpop.f32.mrf.mxu0
        %v439 = vadd.f32 0.0, %v438
        %440 = vmatmul.f32.gmra.mxu0 %v401
        %v441 = vpop.f32.mrf.mxu0
        %v442 = vadd.f32 0.0, %v441
        %443 = vmatmul.f32.gmra.mxu0 %v404
        %v444 = vpop.f32.mrf.mxu0
        %v445 = vadd.f32 0.0, %v444
        %446 = vmatmul.f32.gmra.mxu0 %v407
        %v447 = vpop.f32.mrf.mxu0
        %v448 = vadd.f32 0.0, %v447
        %449 = vmatmul.f32.gmra.mxu0 %v410
        %v450 = vpop.f32.mrf.mxu0
        %v451 = vadd.f32 0.0, %v450
        %452 = vmatmul.f32.gmra.mxu0 %v413
        %v453 = vpop.f32.mrf.mxu0
        %v454 = vadd.f32 0.0, %v453
        %455 = vdwg.mxu0
        %v456 = vld [vmem:[%s2] sm:$0x1]
        %v458 = vperm.slane %v456, 0
        %v460 = vmul.f32 %v433, %v458
        %v461 = vmul.f32 %v436, %v458
        %v462 = vmul.f32 %v439, %v458
        %v463 = vmul.f32 %v442, %v458
        %v464 = vmul.f32 %v445, %v458
        %v465 = vmul.f32 %v448, %v458
        %v466 = vmul.f32 %v451, %v458
        %v467 = vmul.f32 %v454, %v458
        %v468 = vld [vmem:[%s3] sm:$0x1]
        %v470 = vperm.slane %v468, 0
        %v472 = vadd.f32 %v460, %v470
        %v473 = vadd.f32 %v461, %v470
        %v474 = vadd.f32 %v462, %v470
        %v475 = vadd.f32 %v463, %v470
        %v476 = vadd.f32 %v464, %v470
        %v477 = vadd.f32 %v465, %v470
        %v478 = vadd.f32 %v466, %v470
        %v479 = vadd.f32 %v467, %v470
        %v480 = vmax.f32 %v472, 0.0
        %v481 = vmax.f32 %v473, 0.0
        %v482 = vmax.f32 %v474, 0.0
        %v483 = vmax.f32 %v475, 0.0
        %v484 = vmax.f32 %v476, 0.0
        %v485 = vmax.f32 %v477, 0.0
        %v486 = vmax.f32 %v478, 0.0
        %v487 = vmax.f32 %v479, 0.0
        %vm488 = vcmask 31744
        %489 = vst.msk [vmem:[#allocation2] sm:$0xff] %vm488, 0.0
        %vm490 = vcmask 25600
        %491 = vst.msk [vmem:[#allocation2 + $0x8] sm:$0x3] %vm490, 0.0
        %s492 = scalar_lea.vmem [#allocation2], 144
        %493 = vst.msk [vmem:[%s492] sm:$0xff] %vm488, 0.0
        %494 = vst.msk [vmem:[%s492 + $0x8] sm:$0x3] %vm490, 0.0
        %vm495 = vcmask 24576
        %496 = vst.msk [vmem:[#allocation2] sm:$0x1] %vm495, 0.0
        %497 = vst.msk [vmem:[#allocation2 + $0x10] sm:$0x1] %vm495, 0.0
        %498 = vst.msk [vmem:[#allocation2 + $0x20] sm:$0x1] %vm495, 0.0
        %499 = vst.msk [vmem:[#allocation2 + $0x30] sm:$0x1] %vm495, 0.0
        %500 = vst.msk [vmem:[#allocation2 + $0x40] sm:$0x1] %vm495, 0.0
        %501 = vst.msk [vmem:[#allocation2 + $0x50] sm:$0x1] %vm495, 0.0
        %502 = vst.msk [vmem:[#allocation2 + $0x60] sm:$0x1] %vm495, 0.0
        %503 = vst.msk [vmem:[#allocation2 + $0x70] sm:$0x1] %vm495, 0.0
        %504 = vst.msk [vmem:[#allocation2 + $0x80] sm:$0x1] %vm495, 0.0
        %505 = vst.msk [vmem:[#allocation2 + $0x90] sm:$0x1] %vm495, 0.0
        %506 = vst.msk [vmem:[#allocation2 + $0x9] sm:$0x1] %vm495, 0.0
        %507 = vst.msk [vmem:[#allocation2 + $0x19] sm:$0x1] %vm495, 0.0
        %508 = vst.msk [vmem:[#allocation2 + $0x29] sm:$0x1] %vm495, 0.0
        %509 = vst.msk [vmem:[#allocation2 + $0x39] sm:$0x1] %vm495, 0.0
        %510 = vst.msk [vmem:[#allocation2 + $0x49] sm:$0x1] %vm495, 0.0
        %511 = vst.msk [vmem:[#allocation2 + $0x59] sm:$0x1] %vm495, 0.0
        %512 = vst.msk [vmem:[#allocation2 + $0x69] sm:$0x1] %vm495, 0.0
        %513 = vst.msk [vmem:[#allocation2 + $0x79] sm:$0x1] %vm495, 0.0
        %514 = vst.msk [vmem:[#allocation2 + $0x89] sm:$0x1] %vm495, 0.0
        %515 = vst.msk [vmem:[#allocation2 + $0x99] sm:$0x1] %vm495, 0.0
        %s516 = scalar_lea.vmem [#allocation2], 16
        %517 = vst.msk [vmem:[%s516 + $0x1] sm:$0xff] %vm488, %v480
        %518 = vst.msk [vmem:[%s516 + $0x11] sm:$0xff] %vm488, %v481
        %519 = vst.msk [vmem:[%s516 + $0x21] sm:$0xff] %vm488, %v482
        %520 = vst.msk [vmem:[%s516 + $0x31] sm:$0xff] %vm488, %v483
        %521 = vst.msk [vmem:[%s516 + $0x41] sm:$0xff] %vm488, %v484
        %522 = vst.msk [vmem:[%s516 + $0x51] sm:$0xff] %vm488, %v485
        %523 = vst.msk [vmem:[%s516 + $0x61] sm:$0xff] %vm488, %v486
        %524 = vst.msk [vmem:[%s516 + $0x71] sm:$0xff] %vm488, %v487
        %v525 = vld [vmem:[#allocation2] sm:$0xff]
        %v526 = vld [vmem:[#allocation2 + $0x10] sm:$0xff]
        %v527 = vld [vmem:[#allocation2 + $0x20] sm:$0xff]
        %v528 = vld [vmem:[#allocation2 + $0x30] sm:$0xff]
        %v529 = vld [vmem:[#allocation2 + $0x40] sm:$0xff]
        %v530 = vld [vmem:[#allocation2 + $0x50] sm:$0xff]
        %v531 = vld [vmem:[#allocation2 + $0x60] sm:$0xff]
        %v532 = vld [vmem:[#allocation2 + $0x70] sm:$0xff]
        %533 = vst.msk [vmem:[#allocation3] sm:$0xff] %vm488, %v525
        %534 = vst.msk [vmem:[#allocation3 + $0x8] sm:$0xff] %vm488, %v526
        %535 = vst.msk [vmem:[#allocation3 + $0x10] sm:$0xff] %vm488, %v527
        %536 = vst.msk [vmem:[#allocation3 + $0x18] sm:$0xff] %vm488, %v528
        %537 = vst.msk [vmem:[#allocation3 + $0x20] sm:$0xff] %vm488, %v529
        %538 = vst.msk [vmem:[#allocation3 + $0x28] sm:$0xff] %vm488, %v530
        %539 = vst.msk [vmem:[#allocation3 + $0x30] sm:$0xff] %vm488, %v531
        %540 = vst.msk [vmem:[#allocation3 + $0x38] sm:$0xff] %vm488, %v532
        %v541 = vld [vmem:[#allocation2 + $0x1] sm:$0xff]
        %v542 = vld [vmem:[#allocation2 + $0x11] sm:$0xff]
        %v543 = vld [vmem:[#allocation2 + $0x21] sm:$0xff]
        %v544 = vld [vmem:[#allocation2 + $0x31] sm:$0xff]
        %v545 = vld [vmem:[#allocation2 + $0x41] sm:$0xff]
        %v546 = vld [vmem:[#allocation2 + $0x51] sm:$0xff]
        %v547 = vld [vmem:[#allocation2 + $0x61] sm:$0xff]
        %v548 = vld [vmem:[#allocation2 + $0x71] sm:$0xff]
        %557 = vrot.lane.b32.xlu0 %v541, 4
        %v558 = vpop.permute.xlu0 %557
        %559 = vrot.lane.b32.xlu0 %v542, 4
        %v560 = vpop.permute.xlu0 %559
        %561 = vrot.lane.b32.xlu0 %v543, 4
        %v562 = vpop.permute.xlu0 %561
        %563 = vrot.lane.b32.xlu0 %v544, 4
        %v564 = vpop.permute.xlu0 %563
        %565 = vrot.lane.b32.xlu0 %v545, 4
        %v566 = vpop.permute.xlu0 %565
        %567 = vrot.lane.b32.xlu0 %v546, 4
        %v568 = vpop.permute.xlu0 %567
        %569 = vrot.lane.b32.xlu0 %v547, 4
        %v570 = vpop.permute.xlu0 %569
        %571 = vrot.lane.b32.xlu0 %v548, 4
        %v572 = vpop.permute.xlu0 %571
        %vm581 = vcmask 64544
        %582 = vst.msk [vmem:[#allocation3] sm:$0xff] %vm581, %v558
        %583 = vst.msk [vmem:[#allocation3 + $0x8] sm:$0xff] %vm581, %v560
        %584 = vst.msk [vmem:[#allocation3 + $0x10] sm:$0xff] %vm581, %v562
        %585 = vst.msk [vmem:[#allocation3 + $0x18] sm:$0xff] %vm581, %v564
        %586 = vst.msk [vmem:[#allocation3 + $0x20] sm:$0xff] %vm581, %v566
        %587 = vst.msk [vmem:[#allocation3 + $0x28] sm:$0xff] %vm581, %v568
        %588 = vst.msk [vmem:[#allocation3 + $0x30] sm:$0xff] %vm581, %v570
        %589 = vst.msk [vmem:[#allocation3 + $0x38] sm:$0xff] %vm581, %v572
        %v590 = vld [vmem:[#allocation2 + $0x2] sm:$0xff]
        %v591 = vld [vmem:[#allocation2 + $0x12] sm:$0xff]
        %v592 = vld [vmem:[#allocation2 + $0x22] sm:$0xff]
        %v593 = vld [vmem:[#allocation2 + $0x32] sm:$0xff]
        %v594 = vld [vmem:[#allocation2 + $0x42] sm:$0xff]
        %v595 = vld [vmem:[#allocation2 + $0x52] sm:$0xff]
        %v596 = vld [vmem:[#allocation2 + $0x62] sm:$0xff]
        %v597 = vld [vmem:[#allocation2 + $0x72] sm:$0xff]
        %606 = vrot.lane.b32.xlu0 %v590, 8
        %v607 = vpop.permute.xlu0 %606
        %608 = vrot.lane.b32.xlu0 %v591, 8
        %v609 = vpop.permute.xlu0 %608
        %610 = vrot.lane.b32.xlu0 %v592, 8
        %v611 = vpop.permute.xlu0 %610
        %612 = vrot.lane.b32.xlu0 %v593, 8
        %v613 = vpop.permute.xlu0 %612
        %614 = vrot.lane.b32.xlu0 %v594, 8
        %v615 = vpop.permute.xlu0 %614
        %616 = vrot.lane.b32.xlu0 %v595, 8
        %v617 = vpop.permute.xlu0 %616
        %618 = vrot.lane.b32.xlu0 %v596, 8
        %v619 = vpop.permute.xlu0 %618
        %620 = vrot.lane.b32.xlu0 %v597, 8
        %v621 = vpop.permute.xlu0 %620
        %vm630 = vcmask 97344
        %631 = vst.msk [vmem:[#allocation3] sm:$0xff] %vm630, %v607
        %632 = vst.msk [vmem:[#allocation3 + $0x8] sm:$0xff] %vm630, %v609
        %633 = vst.msk [vmem:[#allocation3 + $0x10] sm:$0xff] %vm630, %v611
        %634 = vst.msk [vmem:[#allocation3 + $0x18] sm:$0xff] %vm630, %v613
        %635 = vst.msk [vmem:[#allocation3 + $0x20] sm:$0xff] %vm630, %v615
        %636 = vst.msk [vmem:[#allocation3 + $0x28] sm:$0xff] %vm630, %v617
        %637 = vst.msk [vmem:[#allocation3 + $0x30] sm:$0xff] %vm630, %v619
        %638 = vst.msk [vmem:[#allocation3 + $0x38] sm:$0xff] %vm630, %v621
        %v639 = vld [vmem:[%s516] sm:$0xff]
        %v640 = vld [vmem:[%s516 + $0x10] sm:$0xff]
        %v641 = vld [vmem:[%s516 + $0x20] sm:$0xff]
        %v642 = vld [vmem:[%s516 + $0x30] sm:$0xff]
        %v643 = vld [vmem:[%s516 + $0x40] sm:$0xff]
        %v644 = vld [vmem:[%s516 + $0x50] sm:$0xff]
        %v645 = vld [vmem:[%s516 + $0x60] sm:$0xff]
        %v646 = vld [vmem:[%s516 + $0x70] sm:$0xff]
        %655 = vrot.lane.b32.xlu0 %v639, 12
        %v656 = vpop.permute.xlu0 %655
        %657 = vrot.lane.b32.xlu0 %v640, 12
        %v658 = vpop.permute.xlu0 %657
        %659 = vrot.lane.b32.xlu0 %v641, 12
        %v660 = vpop.permute.xlu0 %659
        %661 = vrot.lane.b32.xlu0 %v642, 12
        %v662 = vpop.permute.xlu0 %661
        %663 = vrot.lane.b32.xlu0 %v643, 12
        %v664 = vpop.permute.xlu0 %663
        %665 = vrot.lane.b32.xlu0 %v644, 12
        %v666 = vpop.permute.xlu0 %665
        %667 = vrot.lane.b32.xlu0 %v645, 12
        %v668 = vpop.permute.xlu0 %667
        %669 = vrot.lane.b32.xlu0 %v646, 12
        %v670 = vpop.permute.xlu0 %669
        %vm679 = vcmask 130144
        %680 = vst.msk [vmem:[#allocation3] sm:$0xff] %vm679, %v656
        %681 = vst.msk [vmem:[#allocation3 + $0x8] sm:$0xff] %vm679, %v658
        %682 = vst.msk [vmem:[#allocation3 + $0x10] sm:$0xff] %vm679, %v660
        %683 = vst.msk [vmem:[#allocation3 + $0x18] sm:$0xff] %vm679, %v662
        %684 = vst.msk [vmem:[#allocation3 + $0x20] sm:$0xff] %vm679, %v664
        %685 = vst.msk [vmem:[#allocation3 + $0x28] sm:$0xff] %vm679, %v666
        %686 = vst.msk [vmem:[#allocation3 + $0x30] sm:$0xff] %vm679, %v668
        %687 = vst.msk [vmem:[#allocation3 + $0x38] sm:$0xff] %vm679, %v670
        %v688 = vld [vmem:[%s516 + $0x1] sm:$0xff]
        %v689 = vld [vmem:[%s516 + $0x11] sm:$0xff]
        %v690 = vld [vmem:[%s516 + $0x21] sm:$0xff]
        %v691 = vld [vmem:[%s516 + $0x31] sm:$0xff]
        %v692 = vld [vmem:[%s516 + $0x41] sm:$0xff]
        %v693 = vld [vmem:[%s516 + $0x51] sm:$0xff]
        %v694 = vld [vmem:[%s516 + $0x61] sm:$0xff]
        %v695 = vld [vmem:[%s516 + $0x71] sm:$0xff]
        %704 = vrot.lane.b32.xlu0 %v688, 16
        %v705 = vpop.permute.xlu0 %704
        %706 = vrot.lane.b32.xlu0 %v689, 16
        %v707 = vpop.permute.xlu0 %706
        %708 = vrot.lane.b32.xlu0 %v690, 16
        %v709 = vpop.permute.xlu0 %708
        %710 = vrot.lane.b32.xlu0 %v691, 16
        %v711 = vpop.permute.xlu0 %710
        %712 = vrot.lane.b32.xlu0 %v692, 16
        %v713 = vpop.permute.xlu0 %712
        %714 = vrot.lane.b32.xlu0 %v693, 16
        %v715 = vpop.permute.xlu0 %714
        %716 = vrot.lane.b32.xlu0 %v694, 16
        %v717 = vpop.permute.xlu0 %716
        %718 = vrot.lane.b32.xlu0 %v695, 16
        %v719 = vpop.permute.xlu0 %718
        %vm728 = vcmask 162944
        %729 = vst.msk [vmem:[#allocation3] sm:$0xff] %vm728, %v705
        %730 = vst.msk [vmem:[#allocation3 + $0x8] sm:$0xff] %vm728, %v707
        %731 = vst.msk [vmem:[#allocation3 + $0x10] sm:$0xff] %vm728, %v709
        %732 = vst.msk [vmem:[#allocation3 + $0x18] sm:$0xff] %vm728, %v711
        %733 = vst.msk [vmem:[#allocation3 + $0x20] sm:$0xff] %vm728, %v713
        %734 = vst.msk [vmem:[#allocation3 + $0x28] sm:$0xff] %vm728, %v715
        %735 = vst.msk [vmem:[#allocation3 + $0x30] sm:$0xff] %vm728, %v717
        %736 = vst.msk [vmem:[#allocation3 + $0x38] sm:$0xff] %vm728, %v719
        %v737 = vld [vmem:[%s516 + $0x2] sm:$0xff]
        %v738 = vld [vmem:[%s516 + $0x12] sm:$0xff]
        %v739 = vld [vmem:[%s516 + $0x22] sm:$0xff]
        %v740 = vld [vmem:[%s516 + $0x32] sm:$0xff]
        %v741 = vld [vmem:[%s516 + $0x42] sm:$0xff]
        %v742 = vld [vmem:[%s516 + $0x52] sm:$0xff]
        %v743 = vld [vmem:[%s516 + $0x62] sm:$0xff]
        %v744 = vld [vmem:[%s516 + $0x72] sm:$0xff]
        %753 = vrot.lane.b32.xlu0 %v737, 20
        %v754 = vpop.permute.xlu0 %753
        %755 = vrot.lane.b32.xlu0 %v738, 20
        %v756 = vpop.permute.xlu0 %755
        %757 = vrot.lane.b32.xlu0 %v739, 20
        %v758 = vpop.permute.xlu0 %757
        %759 = vrot.lane.b32.xlu0 %v740, 20
        %v760 = vpop.permute.xlu0 %759
        %761 = vrot.lane.b32.xlu0 %v741, 20
        %v762 = vpop.permute.xlu0 %761
        %763 = vrot.lane.b32.xlu0 %v742, 20
        %v764 = vpop.permute.xlu0 %763
        %765 = vrot.lane.b32.xlu0 %v743, 20
        %v766 = vpop.permute.xlu0 %765
        %767 = vrot.lane.b32.xlu0 %v744, 20
        %v768 = vpop.permute.xlu0 %767
        %vm777 = vcmask 195744
        %778 = vst.msk [vmem:[#allocation3] sm:$0xff] %vm777, %v754
        %779 = vst.msk [vmem:[#allocation3 + $0x8] sm:$0xff] %vm777, %v756
        %780 = vst.msk [vmem:[#allocation3 + $0x10] sm:$0xff] %vm777, %v758
        %781 = vst.msk [vmem:[#allocation3 + $0x18] sm:$0xff] %vm777, %v760
        %782 = vst.msk [vmem:[#allocation3 + $0x20] sm:$0xff] %vm777, %v762
        %783 = vst.msk [vmem:[#allocation3 + $0x28] sm:$0xff] %vm777, %v764
        %784 = vst.msk [vmem:[#allocation3 + $0x30] sm:$0xff] %vm777, %v766
        %785 = vst.msk [vmem:[#allocation3 + $0x38] sm:$0xff] %vm777, %v768
        %s786 = scalar_lea.vmem [#allocation2], 32
        %v787 = vld [vmem:[%s786] sm:$0xff]
        %v788 = vld [vmem:[%s786 + $0x10] sm:$0xff]
        %v789 = vld [vmem:[%s786 + $0x20] sm:$0xff]
        %v790 = vld [vmem:[%s786 + $0x30] sm:$0xff]
        %v791 = vld [vmem:[%s786 + $0x40] sm:$0xff]
        %v792 = vld [vmem:[%s786 + $0x50] sm:$0xff]
        %v793 = vld [vmem:[%s786 + $0x60] sm:$0xff]
        %v794 = vld [vmem:[%s786 + $0x70] sm:$0xff]
        %803 = vrot.lane.b32.xlu0 %v787, 24
        %v804 = vpop.permute.xlu0 %803
        %805 = vrot.lane.b32.xlu0 %v788, 24
        %v806 = vpop.permute.xlu0 %805
        %807 = vrot.lane.b32.xlu0 %v789, 24
        %v808 = vpop.permute.xlu0 %807
        %809 = vrot.lane.b32.xlu0 %v790, 24
        %v810 = vpop.permute.xlu0 %809
        %811 = vrot.lane.b32.xlu0 %v791, 24
        %v812 = vpop.permute.xlu0 %811
        %813 = vrot.lane.b32.xlu0 %v792, 24
        %v814 = vpop.permute.xlu0 %813
        %815 = vrot.lane.b32.xlu0 %v793, 24
        %v816 = vpop.permute.xlu0 %815
        %817 = vrot.lane.b32.xlu0 %v794, 24
        %v818 = vpop.permute.xlu0 %817
        %vm827 = vcmask 228544
        %828 = vst.msk [vmem:[#allocation3] sm:$0xff] %vm827, %v804
        %829 = vst.msk [vmem:[#allocation3 + $0x8] sm:$0xff] %vm827, %v806
        %830 = vst.msk [vmem:[#allocation3 + $0x10] sm:$0xff] %vm827, %v808
        %831 = vst.msk [vmem:[#allocation3 + $0x18] sm:$0xff] %vm827, %v810
        %832 = vst.msk [vmem:[#allocation3 + $0x20] sm:$0xff] %vm827, %v812
        %833 = vst.msk [vmem:[#allocation3 + $0x28] sm:$0xff] %vm827, %v814
        %834 = vst.msk [vmem:[#allocation3 + $0x30] sm:$0xff] %vm827, %v816
        %835 = vst.msk [vmem:[#allocation3 + $0x38] sm:$0xff] %vm827, %v818
        %v836 = vld [vmem:[%s786 + $0x1] sm:$0xff]
        %v837 = vld [vmem:[%s786 + $0x11] sm:$0xff]
        %v838 = vld [vmem:[%s786 + $0x21] sm:$0xff]
        %v839 = vld [vmem:[%s786 + $0x31] sm:$0xff]
        %v840 = vld [vmem:[%s786 + $0x41] sm:$0xff]
        %v841 = vld [vmem:[%s786 + $0x51] sm:$0xff]
        %v842 = vld [vmem:[%s786 + $0x61] sm:$0xff]
        %v843 = vld [vmem:[%s786 + $0x71] sm:$0xff]
        %852 = vrot.lane.b32.xlu0 %v836, 28
        %v853 = vpop.permute.xlu0 %852
        %854 = vrot.lane.b32.xlu0 %v837, 28
        %v855 = vpop.permute.xlu0 %854
        %856 = vrot.lane.b32.xlu0 %v838, 28
        %v857 = vpop.permute.xlu0 %856
        %858 = vrot.lane.b32.xlu0 %v839, 28
        %v859 = vpop.permute.xlu0 %858
        %860 = vrot.lane.b32.xlu0 %v840, 28
        %v861 = vpop.permute.xlu0 %860
        %862 = vrot.lane.b32.xlu0 %v841, 28
        %v863 = vpop.permute.xlu0 %862
        %864 = vrot.lane.b32.xlu0 %v842, 28
        %v865 = vpop.permute.xlu0 %864
        %866 = vrot.lane.b32.xlu0 %v843, 28
        %v867 = vpop.permute.xlu0 %866
        %vm876 = vcmask 261344
        %877 = vst.msk [vmem:[#allocation3] sm:$0xff] %vm876, %v853
        %878 = vst.msk [vmem:[#allocation3 + $0x8] sm:$0xff] %vm876, %v855
        %879 = vst.msk [vmem:[#allocation3 + $0x10] sm:$0xff] %vm876, %v857
        %880 = vst.msk [vmem:[#allocation3 + $0x18] sm:$0xff] %vm876, %v859
        %881 = vst.msk [vmem:[#allocation3 + $0x20] sm:$0xff] %vm876, %v861
        %882 = vst.msk [vmem:[#allocation3 + $0x28] sm:$0xff] %vm876, %v863
        %883 = vst.msk [vmem:[#allocation3 + $0x30] sm:$0xff] %vm876, %v865
        %884 = vst.msk [vmem:[#allocation3 + $0x38] sm:$0xff] %vm876, %v867
        %v885 = vld [vmem:[%s786 + $0x2] sm:$0xff]
        %v886 = vld [vmem:[%s786 + $0x12] sm:$0xff]
        %v887 = vld [vmem:[%s786 + $0x22] sm:$0xff]
        %v888 = vld [vmem:[%s786 + $0x32] sm:$0xff]
        %v889 = vld [vmem:[%s786 + $0x42] sm:$0xff]
        %v890 = vld [vmem:[%s786 + $0x52] sm:$0xff]
        %v891 = vld [vmem:[%s786 + $0x62] sm:$0xff]
        %v892 = vld [vmem:[%s786 + $0x72] sm:$0xff]
        %901 = vrot.lane.b32.xlu0 %v885, 32
        %v902 = vpop.permute.xlu0 %901
        %903 = vrot.lane.b32.xlu0 %v886, 32
        %v904 = vpop.permute.xlu0 %903
        %905 = vrot.lane.b32.xlu0 %v887, 32
        %v906 = vpop.permute.xlu0 %905
        %907 = vrot.lane.b32.xlu0 %v888, 32
        %v908 = vpop.permute.xlu0 %907
        %909 = vrot.lane.b32.xlu0 %v889, 32
        %v910 = vpop.permute.xlu0 %909
        %911 = vrot.lane.b32.xlu0 %v890, 32
        %v912 = vpop.permute.xlu0 %911
        %913 = vrot.lane.b32.xlu0 %v891, 32
        %v914 = vpop.permute.xlu0 %913
        %915 = vrot.lane.b32.xlu0 %v892, 32
        %v916 = vpop.permute.xlu0 %915
        %vm925 = vcmask 294144
        %926 = vst.msk [vmem:[#allocation3] sm:$0xff] %vm925, %v902
        %927 = vst.msk [vmem:[#allocation3 + $0x8] sm:$0xff] %vm925, %v904
        %928 = vst.msk [vmem:[#allocation3 + $0x10] sm:$0xff] %vm925, %v906
        %929 = vst.msk [vmem:[#allocation3 + $0x18] sm:$0xff] %vm925, %v908
        %930 = vst.msk [vmem:[#allocation3 + $0x20] sm:$0xff] %vm925, %v910
        %931 = vst.msk [vmem:[#allocation3 + $0x28] sm:$0xff] %vm925, %v912
        %932 = vst.msk [vmem:[#allocation3 + $0x30] sm:$0xff] %vm925, %v914
        %933 = vst.msk [vmem:[#allocation3 + $0x38] sm:$0xff] %vm925, %v916
        %v934 = vld [vmem:[#allocation3] sm:$0xff]
        %v935 = vld [vmem:[#allocation3 + $0x8] sm:$0xff]
        %v936 = vld [vmem:[#allocation3 + $0x10] sm:$0xff]
        %v937 = vld [vmem:[#allocation3 + $0x18] sm:$0xff]
        %v938 = vld [vmem:[#allocation3 + $0x20] sm:$0xff]
        %v939 = vld [vmem:[#allocation3 + $0x28] sm:$0xff]
        %v940 = vld [vmem:[#allocation3 + $0x30] sm:$0xff]
        %v941 = vld [vmem:[#allocation3 + $0x38] sm:$0xff]
        %v942 = vld [vmem:[%s4] sm:$0xff]
        %v943 = vld [vmem:[%s4 + $0x8] sm:$0xff]
        %v944 = vld [vmem:[%s4 + $0x10] sm:$0xff]
        %v945 = vld [vmem:[%s4 + $0x18] sm:$0xff]
        %v946 = vld [vmem:[%s4 + $0x20] sm:$0xf]
        %vm947 = vcmask 293888
        %v949 = vsel %vm947, %v934, 0
        %v952 = vsel %vm947, %v935, 0
        %v955 = vsel %vm947, %v936, 0
        %v958 = vsel %vm947, %v937, 0
        %v961 = vsel %vm947, %v938, 0
        %v964 = vsel %vm947, %v939, 0
        %v967 = vsel %vm947, %v940, 0
        %v970 = vsel %vm947, %v941, 0
        %vm972 = vcmask 1043456
        %v974 = vsel %vm972, %v946, 0
        %976 = vmatpush.msra.mxu0 0.0
        %977 = vmatpush.msra.mxu0 0.0
        %978 = vmatpush.msra.mxu0 0.0
        %979 = vmatpush.msra.mxu0 0.0
        %980 = vmatpush.msra.mxu0 0.0
        %981 = vmatpush.msra.mxu0 0.0
        %982 = vmatpush.msra.mxu0 0.0
        %983 = vmatpush.msra.mxu0 0.0
        %984 = vmatpush.msra.mxu0 0.0
        %985 = vmatpush.msra.mxu0 0.0
        %986 = vmatpush.msra.mxu0 0.0
        %987 = vmatpush.msra.mxu0 %v974
        %988 = vmatpush.msra.mxu0 %v945
        %989 = vmatpush.msra.mxu0 %v944
        %990 = vmatpush.msra.mxu0 %v943
        %991 = vmatpush.msra.mxu0 %v942
        %992 = vmatmul.f32.gmra.mxu0 %v949
        %v993 = vpop.f32.mrf.mxu0
        %v994 = vadd.f32 0.0, %v993
        %995 = vmatmul.f32.gmra.mxu0 %v952
        %v996 = vpop.f32.mrf.mxu0
        %v997 = vadd.f32 0.0, %v996
        %998 = vmatmul.f32.gmra.mxu0 %v955
        %v999 = vpop.f32.mrf.mxu0
        %v1000 = vadd.f32 0.0, %v999
        %1001 = vmatmul.f32.gmra.mxu0 %v958
        %v1002 = vpop.f32.mrf.mxu0
        %v1003 = vadd.f32 0.0, %v1002
        %1004 = vmatmul.f32.gmra.mxu0 %v961
        %v1005 = vpop.f32.mrf.mxu0
        %v1006 = vadd.f32 0.0, %v1005
        %1007 = vmatmul.f32.gmra.mxu0 %v964
        %v1008 = vpop.f32.mrf.mxu0
        %v1009 = vadd.f32 0.0, %v1008
        %1010 = vmatmul.f32.gmra.mxu0 %v967
        %v1011 = vpop.f32.mrf.mxu0
        %v1012 = vadd.f32 0.0, %v1011
        %1013 = vmatmul.f32.gmra.mxu0 %v970
        %v1014 = vpop.f32.mrf.mxu0
        %v1015 = vadd.f32 0.0, %v1014
        %1016 = vdwg.mxu0
        %v1017 = vld [vmem:[%s5] sm:$0x1]
        %v1019 = vperm.slane %v1017, 0
        %v1021 = vmul.f32 %v994, %v1019
        %v1022 = vmul.f32 %v997, %v1019
        %v1023 = vmul.f32 %v1000, %v1019
        %v1024 = vmul.f32 %v1003, %v1019
        %v1025 = vmul.f32 %v1006, %v1019
        %v1026 = vmul.f32 %v1009, %v1019
        %v1027 = vmul.f32 %v1012, %v1019
        %v1028 = vmul.f32 %v1015, %v1019
        %v1029 = vld [vmem:[%s6] sm:$0x1]
        %v1031 = vperm.slane %v1029, 0
        %v1033 = vadd.f32 %v1021, %v1031
        %v1034 = vadd.f32 %v1022, %v1031
        %v1035 = vadd.f32 %v1023, %v1031
        %v1036 = vadd.f32 %v1024, %v1031
        %v1037 = vadd.f32 %v1025, %v1031
        %v1038 = vadd.f32 %v1026, %v1031
        %v1039 = vadd.f32 %v1027, %v1031
        %v1040 = vadd.f32 %v1028, %v1031
        %v1041 = vmax.f32 %v1033, 0.0
        %v1042 = vmax.f32 %v1034, 0.0
        %v1043 = vmax.f32 %v1035, 0.0
        %v1044 = vmax.f32 %v1036, 0.0
        %v1045 = vmax.f32 %v1037, 0.0
        %v1046 = vmax.f32 %v1038, 0.0
        %v1047 = vmax.f32 %v1039, 0.0
        %v1048 = vmax.f32 %v1040, 0.0
        %v1049 = vld [vmem:[%s7] sm:$0xf]
        %v1051 = vsel %vm488, %v1041, 0
        %v1054 = vsel %vm488, %v1042, 0
        %v1057 = vsel %vm488, %v1043, 0
        %v1060 = vsel %vm488, %v1044, 0
        %v1063 = vsel %vm488, %v1045, 0
        %v1066 = vsel %vm488, %v1046, 0
        %v1069 = vsel %vm488, %v1047, 0
        %v1072 = vsel %vm488, %v1048, 0
        %v1075 = vsel %vm972, %v1049, 0
        %1077 = vmatpush.msra.mxu0 0.0
        %1078 = vmatpush.msra.mxu0 0.0
        %1079 = vmatpush.msra.mxu0 0.0
        %1080 = vmatpush.msra.mxu0 0.0
        %1081 = vmatpush.msra.mxu0 0.0
        %1082 = vmatpush.msra.mxu0 0.0
        %1083 = vmatpush.msra.mxu0 0.0
        %1084 = vmatpush.msra.mxu0 0.0
        %1085 = vmatpush.msra.mxu0 0.0
        %1086 = vmatpush.msra.mxu0 0.0
        %1087 = vmatpush.msra.mxu0 0.0
        %1088 = vmatpush.msra.mxu0 0.0
        %1089 = vmatpush.msra.mxu0 0.0
        %1090 = vmatpush.msra.mxu0 0.0
        %1091 = vmatpush.msra.mxu0 0.0
        %1092 = vmatpush.msra.mxu0 %v1075
        %1093 = vmatmul.f32.gmra.mxu0 %v1051
        %v1094 = vpop.f32.mrf.mxu0
        %v1095 = vadd.f32 0.0, %v1094
        %1096 = vmatmul.f32.gmra.mxu0 %v1054
        %v1097 = vpop.f32.mrf.mxu0
        %v1098 = vadd.f32 0.0, %v1097
        %1099 = vmatmul.f32.gmra.mxu0 %v1057
        %v1100 = vpop.f32.mrf.mxu0
        %v1101 = vadd.f32 0.0, %v1100
        %1102 = vmatmul.f32.gmra.mxu0 %v1060
        %v1103 = vpop.f32.mrf.mxu0
        %v1104 = vadd.f32 0.0, %v1103
        %1105 = vmatmul.f32.gmra.mxu0 %v1063
        %v1106 = vpop.f32.mrf.mxu0
        %v1107 = vadd.f32 0.0, %v1106
        %1108 = vmatmul.f32.gmra.mxu0 %v1066
        %v1109 = vpop.f32.mrf.mxu0
        %v1110 = vadd.f32 0.0, %v1109
        %1111 = vmatmul.f32.gmra.mxu0 %v1069
        %v1112 = vpop.f32.mrf.mxu0
        %v1113 = vadd.f32 0.0, %v1112
        %1114 = vmatmul.f32.gmra.mxu0 %v1072
        %v1115 = vpop.f32.mrf.mxu0
        %v1116 = vadd.f32 0.0, %v1115
        %1117 = vdwg.mxu0
        %v1118 = vld [vmem:[%s8] sm:$0x1]
        %v1120 = vperm.slane %v1118, 0
        %v1122 = vmul.f32 %v1095, %v1120
        %v1123 = vmul.f32 %v1098, %v1120
        %v1124 = vmul.f32 %v1101, %v1120
        %v1125 = vmul.f32 %v1104, %v1120
        %v1126 = vmul.f32 %v1107, %v1120
        %v1127 = vmul.f32 %v1110, %v1120
        %v1128 = vmul.f32 %v1113, %v1120
        %v1129 = vmul.f32 %v1116, %v1120
        %v1130 = vld [vmem:[%s9] sm:$0x1]
        %v1132 = vperm.slane %v1130, 0
        %v1134 = vadd.f32 %v1122, %v1132
        %v1135 = vadd.f32 %v1123, %v1132
        %v1136 = vadd.f32 %v1124, %v1132
        %v1137 = vadd.f32 %v1125, %v1132
        %v1138 = vadd.f32 %v1126, %v1132
        %v1139 = vadd.f32 %v1127, %v1132
        %v1140 = vadd.f32 %v1128, %v1132
        %v1141 = vadd.f32 %v1129, %v1132
        %v1142 = vadd.f32 %v1134, %v380
        %v1143 = vadd.f32 %v1135, %v381
        %v1144 = vadd.f32 %v1136, %v382
        %v1145 = vadd.f32 %v1137, %v383
        %v1146 = vadd.f32 %v1138, %v384
        %v1147 = vadd.f32 %v1139, %v385
        %v1148 = vadd.f32 %v1140, %v386
        %v1149 = vadd.f32 %v1141, %v387
        %v1150 = vmax.f32 %v1142, 0.0
        %v1151 = vmax.f32 %v1143, 0.0
        %v1152 = vmax.f32 %v1144, 0.0
        %v1153 = vmax.f32 %v1145, 0.0
        %v1154 = vmax.f32 %v1146, 0.0
        %v1155 = vmax.f32 %v1147, 0.0
        %v1156 = vmax.f32 %v1148, 0.0
        %v1157 = vmax.f32 %v1149, 0.0
        %1158 = vst.msk [vmem:[%s379] sm:$0xff] %vm390, %v1150
        %1159 = vst.msk [vmem:[%s379 + $0x8] sm:$0xff] %vm390, %v1151
        %1160 = vst.msk [vmem:[%s379 + $0x10] sm:$0xff] %vm390, %v1152
        %1161 = vst.msk [vmem:[%s379 + $0x18] sm:$0xff] %vm390, %v1153
        %1162 = vst.msk [vmem:[%s379 + $0x20] sm:$0xff] %vm390, %v1154
        %1163 = vst.msk [vmem:[%s379 + $0x28] sm:$0xff] %vm390, %v1155
        %1164 = vst.msk [vmem:[%s379 + $0x30] sm:$0xff] %vm390, %v1156
        %1165 = vst.msk [vmem:[%s379 + $0x38] sm:$0xff] %vm390, %v1157
        %s1166 = sand.u32 %s250, 1
        %s1167 = scalar_lea.sflag [#allocation6], %s1166
        %s1168 = sand.u32 %s250, 1
        %s1169 = smul.addr %s1168, 64
        %s1170 = scalar_lea.vmem [#allocation7], %s1169
        // Predicated region
        $region65: #{tpu_custom_call.1} parent=59 // pred_check
          %p1171 = pneg %p260
        $region66: #{tpu_custom_call.1} parent=59 // pred_check_branch
          %1173 = sbr.rel (%p1171) target = $region68
        $region67: #{tpu_custom_call.1} parent=59 // pred_region
          %1175 = vsyncadd %s1167, 0
          %s1176 = smul.addr %s27, 8
          %s1177 = smul.addr %s1176, 8
          %s1178 = scalar_lea.hbm %s10, %s1177
          %s1179 = sshll.u32 %s1170, 4
          %s1180 = int_to_ptr.vmem [resolvable:$true] %s1179
          %s1181 = sshll.u32 %s1178, 4
          %s1182 = int_to_ptr.hbm [resolvable:$true] %s1181
          %1187 = dma.vmem_to_hbm [thread:$0]  %s1180, 1024, %s1182, %s1167, 128, 128, 8
        $region68: #{tpu_custom_call.1} parent=59 // pred_fallthru
          _
      $region60: #{tpu_custom_call.1} parent=5 // pred_fallthru
        _
      %p1188 = scmp.le.s32.totalorder 2, %s22
      // Predicated region
      $region69: #{tpu_custom_call.1} parent=5 // pred_check
        %p1189 = pneg %p1188
      $region70: #{tpu_custom_call.1} parent=5 // pred_check_branch
        %1191 = sbr.rel (%p1189) target = $region72
      $region71: #{tpu_custom_call.1} parent=5 // pred_region
        %s1192 = ssub.s32 %s22, 2
        // Predicated region
        $region73: #{tpu_custom_call.1} parent=71 // pred_check
          %p1193 = pneg %p266
        $region74: #{tpu_custom_call.1} parent=71 // pred_check_branch
          %1195 = sbr.rel (%p1193) target = $region76
        $region75: #{tpu_custom_call.1} parent=71 // pred_region
          %s1196 = sand.u32 %s251, 1
          %s1197 = scalar_lea.sflag [#allocation6], %s1196
          %s1198 = sand.u32 %s251, 1
          %s1199 = smul.addr %s1198, 64
          %s1200 = scalar_lea.vmem [#allocation7], %s1199
          %1202 = dma.done %s1197, 1024
        $region76: #{tpu_custom_call.1} parent=71 // pred_fallthru
          _
      $region72: #{tpu_custom_call.1} parent=5 // pred_fallthru
        _
    $region6: #{tpu_custom_call.1} parent=1 // loop_footer
      %s26 = sadd.s32 1, %s22
    $region7: #{tpu_custom_call.1} parent=1 // loop_footer_branch
      %21 = sbr.rel target = $region3
    $region8: #{tpu_custom_call.1} parent=1 // loop_exit
      _
    %1203 = vsyncpa [#allocation5], 1
    %s1204 = scalar_lea.sflag [#allocation5], 1
    %1205 = vsyncpa %s1204, 1
    %1206 = vsyncpa [#allocation6], 1
    %s1207 = scalar_lea.sflag [#allocation6], 1
    %1208 = vsyncpa %s1207, 1

</llo_original>
